<compile_context>
chip_gen: v5e
topology: v5e:2x2
jax: 0.10.0
libtpu: 0.0.40
codegen_flags: <defaults>
</compile_context>

<pallas_src>
import math
import jax
import jax.numpy as jnp
from jax import lax
from jax.experimental import pallas as pl
from jax.experimental.pallas import tpu as pltpu


def _encoder_lstm_kernel(x_ref, h0_ref, c0_ref, wih0_ref, wih_rest_ref,
                         whh_ref, bias_ref, hN_ref, cN_ref,
                         preact_scr, y_scr):
    """Fused multi-layer LSTM encoder.

    x_ref       : (T*Bp, D)      flattened time-major, batch padded to Bp
    h0_ref      : (L, Bp, H)     initial hidden state
    c0_ref      : (L, Bp, H)     initial cell state
    wih0_ref    : (D, 4H)        layer-0 input weights, transposed
    wih_rest_ref: (max(L-1,1), H, 4H)  input weights of layers 1..L-1
    whh_ref     : (L, H, 4H)     hidden weights, transposed
    bias_ref    : (L, 1, 4H)     fused b_ih + b_hh per layer
    hN_ref/cN_ref: (L, Bp, H)    final states (outputs)
    preact_scr  : (T*Bp, 4H) f32 VMEM scratch — hoisted input projections
    y_scr       : (T*Bp, H)  f32 VMEM scratch — inter-layer sequence output
    """
    L, Bp, H = h0_ref.shape
    TB = x_ref.shape[0]
    T = TB // Bp

    for layer in range(L):          # num_layers is static -> Python unroll
        # ---- Hoisted input projection: one big MXU matmul per layer. ----
        if layer == 0:
            inp = x_ref[...]                    # (T*Bp, D)
            w_in = wih0_ref[...]                # (D, 4H)
        else:
            inp = y_scr[...]                    # (T*Bp, H)  previous layer's y
            w_in = wih_rest_ref[layer - 1]      # (H, 4H)
        preact_scr[...] = (
            jnp.dot(inp, w_in, preferred_element_type=jnp.float32)
            + bias_ref[layer])                  # bias folded in once, not per-step

        whh = whh_ref[layer]                    # (H, 4H), resident for the loop
        h_init = h0_ref[layer].astype(jnp.float32)   # (Bp, H)
        c_init = c0_ref[layer].astype(jnp.float32)
        write_y = layer < L - 1                 # last layer's y is not needed

        def step(t, carry, whh=whh, write_y=write_y):
            h, c = carry
            row = pl.multiple_of(t * Bp, Bp)    # 8-row aligned dynamic slice
            gates = preact_scr[pl.ds(row, Bp), :] + jnp.dot(
                h, whh, preferred_element_type=jnp.float32)      # (Bp, 4H)
            # Full-vreg activations (EUP), then static lane slices per gate.
            sig = jax.nn.sigmoid(gates)
            tah = jnp.tanh(gates)
            i_g = sig[:, 0 * H:1 * H]
            f_g = sig[:, 1 * H:2 * H]
            g_g = tah[:, 2 * H:3 * H]
            o_g = sig[:, 3 * H:4 * H]
            c_new = f_g * c + i_g * g_g
            h_new = o_g * jnp.tanh(c_new)
            if write_y:
                y_scr[pl.ds(row, Bp), :] = h_new
            return h_new, c_new

        h_fin, c_fin = lax.fori_loop(0, T, step, (h_init, c_init), unroll=True)

        # Final-state write happens exactly once per layer (no per-step stores).
        hN_ref[layer] = h_fin.astype(hN_ref.dtype)
        cN_ref[layer] = c_fin.astype(cN_ref.dtype)


def encoder_forward(video_tensor, encoder_hidden, params):
    """Equivalent of Encoder.forward.

    video_tensor  : (B, T, resnet_dim)   batch-first, like PyTorch
    encoder_hidden: (h0, c0) each (num_layers, B, H)
    returns (h_n, c_n) each (num_layers, B, H)
    """
    h0, c0 = encoder_hidden
    B, T, D = video_tensor.shape
    L, _, H = h0.shape
    Bp = ((B + 7) // 8) * 8                      # pad batch to sublane multiple

    x = jnp.transpose(video_tensor, (1, 0, 2))   # -> time-major (T, B, D)
    x = jnp.pad(x, ((0, 0), (0, Bp - B), (0, 0)))
    x_flat = x.reshape(T * Bp, D).astype(jnp.float32)

    h0p = jnp.pad(h0, ((0, 0), (0, Bp - B), (0, 0))).astype(jnp.float32)
    c0p = jnp.pad(c0, ((0, 0), (0, Bp - B), (0, 0))).astype(jnp.float32)

    wih0_t, wih_rest_t, whh_t, bias = params

    # NOTE: batch is tiny here; if B grows, add a batch-chunk "parallel" grid
    # axis (time stays a recurrence) to use both TensorCores on v7x.
    hN, cN = pl.pallas_call(
        _encoder_lstm_kernel,
        out_shape=(
            jax.ShapeDtypeStruct((L, Bp, H), h0.dtype),
            jax.ShapeDtypeStruct((L, Bp, H), c0.dtype),
        ),
        scratch_shapes=[
            pltpu.VMEM((T * Bp, 4 * H), jnp.float32),   # hoisted preactivations
            pltpu.VMEM((T * Bp, H), jnp.float32),       # inter-layer y (stays in VMEM)
        ],
    )(x_flat, h0p, c0p, wih0_t, wih_rest_t, whh_t, bias)

    return hN[:, :B, :], cN[:, :B, :]


def init_lstm_params(key, resnet_dim, hidden_size, num_layers):
    """Deterministic init matching PyTorch nn.LSTM shapes, repacked for the kernel."""
    bound = 1.0 / math.sqrt(hidden_size)
    wih_rest, whh_all, bias_all = [], [], []
    wih0_t = None
    for layer in range(num_layers):
        d_in = resnet_dim if layer == 0 else hidden_size
        key, k1, k2, k3, k4 = jax.random.split(key, 5)
        w_ih = jax.random.uniform(k1, (4 * hidden_size, d_in),
                                  minval=-bound, maxval=bound, dtype=jnp.float32)
        w_hh = jax.random.uniform(k2, (4 * hidden_size, hidden_size),
                                  minval=-bound, maxval=bound, dtype=jnp.float32)
        b_ih = jax.random.uniform(k3, (4 * hidden_size,),
                                  minval=-bound, maxval=bound, dtype=jnp.float32)
        b_hh = jax.random.uniform(k4, (4 * hidden_size,),
                                  minval=-bound, maxval=bound, dtype=jnp.float32)
        if layer == 0:
            wih0_t = w_ih.T                              # (D, 4H)
        else:
            wih_rest.append(w_ih.T)                      # (H, 4H)
        whh_all.append(w_hh.T)                           # (H, 4H)
        bias_all.append((b_ih + b_hh)[None, :])          # (1, 4H) fused bias
    if wih_rest:
        wih_rest_t = jnp.stack(wih_rest, axis=0)         # (L-1, H, 4H)
    else:  # num_layers == 1 -> dummy, never read by the kernel
        wih_rest_t = jnp.zeros((1, hidden_size, 4 * hidden_size), jnp.float32)
    return (wih0_t, wih_rest_t,
            jnp.stack(whh_all, axis=0),                  # (L, H, 4H)
            jnp.stack(bias_all, axis=0))                 # (L, 1, 4H)


def encoder_forward_ref(video_tensor, encoder_hidden, params):
    """Pure-JAX reference (PyTorch nn.LSTM semantics) for validation."""
    h0, c0 = encoder_hidden
    wih0_t, wih_rest_t, whh_t, bias = params
    x = jnp.transpose(video_tensor, (1, 0, 2))           # (T, B, D)
    L = h0.shape[0]
    H = h0.shape[-1]
    h_fin, c_fin = [], []
    for layer in range(L):
        w_in = wih0_t if layer == 0 else wih_rest_t[layer - 1]
        whh, b = whh_t[layer], bias[layer]
        h, c = h0[layer], c0[layer]
        ys = []
        for t in range(x.shape[0]):
            g = x[t] @ w_in + b + h @ whh
            i = jax.nn.sigmoid(g[:, 0 * H:1 * H])
            f = jax.nn.sigmoid(g[:, 1 * H:2 * H])
            gg = jnp.tanh(g[:, 2 * H:3 * H])
            o = jax.nn.sigmoid(g[:, 3 * H:4 * H])
            c = f * c + i * gg
            h = o * jnp.tanh(c)
            ys.append(h)
        x = jnp.stack(ys, axis=0)
        h_fin.append(h)
        c_fin.append(c)
    return jnp.stack(h_fin, axis=0), jnp.stack(c_fin, axis=0)


if __name__ == "__main__":
    # Small synthetic shapes consistent with the module.
    B, T = 2, 8
    resnet_dim = 64
    hidden_size = 32
    num_layers = 2

    key = jax.random.PRNGKey(0)
    key, k_vid = jax.random.split(key)
    video = jax.random.normal(k_vid, (B, T, resnet_dim), dtype=jnp.float32)

    # Encoder.init_hidden -> zero initial hidden/cell state.
    h0 = jnp.zeros((num_layers, B, hidden_size), jnp.float32)
    c0 = jnp.zeros((num_layers, B, hidden_size), jnp.float32)

    params = init_lstm_params(key, resnet_dim, hidden_size, num_layers)

    h_n, c_n = encoder_forward(video, (h0, c0), params)
    jax.block_until_ready((h_n, c_n))

    assert h_n.shape == (num_layers, B, hidden_size)
    assert c_n.shape == (num_layers, B, hidden_size)

    # Correctness check against the pure-JAX (PyTorch-semantics) reference.
    h_ref, c_ref = encoder_forward_ref(video, (h0, c0), params)
    assert float(jnp.max(jnp.abs(h_n - h_ref))) < 1e-4
    assert float(jnp.max(jnp.abs(c_n - c_ref))) < 1e-4

    print("KERNEL_OK")
</pallas_src>

<mosaic_0001>
module attributes {stable_mosaic.version = 11 : i64} {
  func.func @_encoder_lstm_kernel(%arg0: memref<64x64xf32, #tpu.memory_space<vmem>>, %arg1: memref<2x8x32xf32, #tpu.memory_space<vmem>>, %arg2: memref<2x8x32xf32, #tpu.memory_space<vmem>>, %arg3: memref<64x128xf32, #tpu.memory_space<vmem>>, %arg4: memref<1x32x128xf32, #tpu.memory_space<vmem>>, %arg5: memref<2x32x128xf32, #tpu.memory_space<vmem>>, %arg6: memref<2x1x128xf32, #tpu.memory_space<vmem>>, %arg7: memref<2x8x32xf32, #tpu.memory_space<vmem>>, %arg8: memref<2x8x32xf32, #tpu.memory_space<vmem>>, %arg9: memref<64x128xf32, #tpu.memory_space<vmem>>, %arg10: memref<64x32xf32, #tpu.memory_space<vmem>>) attributes {dimension_semantics = [], scalar_prefetch = 0 : i64, scratch_operands = 2 : i64, tpu.core_type = #tpu.core_type<tc>} {
    %c0 = arith.constant 0 : index
    %c0_0 = arith.constant 0 : index
    %0 = vector.load %arg0[%c0, %c0_0] : memref<64x64xf32, #tpu.memory_space<vmem>>, vector<64x64xf32>
    %c0_1 = arith.constant 0 : index
    %c0_2 = arith.constant 0 : index
    %1 = vector.load %arg3[%c0_1, %c0_2] : memref<64x128xf32, #tpu.memory_space<vmem>>, vector<64x128xf32>
    %cst = arith.constant dense<0.000000e+00> : vector<64x128xf32>
    %2 = tpu.matmul %0, %1, %cst {dimension_numbers = #tpu.dot_dimension_numbers<[1], [0], [0], [1], [0, 0, 1, 1], [], []>} : vector<64x64xf32>, vector<64x128xf32>, vector<64x128xf32> -> vector<64x128xf32>
    %c0_3 = arith.constant 0 : index
    %c0_4 = arith.constant 0 : index
    %c0_5 = arith.constant 0 : index
    %3 = vector.load %arg6[%c0_3, %c0_4, %c0_5] : memref<2x1x128xf32, #tpu.memory_space<vmem>>, vector<1x1x128xf32>
    %4 = vector.shape_cast %3 : vector<1x1x128xf32> to vector<1x128xf32>
    %5 = vector.broadcast %4 : vector<1x128xf32> to vector<64x128xf32>
    %6 = arith.addf %2, %5 : vector<64x128xf32>
    %c0_6 = arith.constant 0 : index
    %c0_7 = arith.constant 0 : index
    %7 = vector.load %arg9[%c0_6, %c0_7] : memref<64x128xf32, #tpu.memory_space<vmem>>, vector<64x128xf32>
    tpu.vector_store %arg9[%c0_6, %c0_7], %6 {strides = array<i32>} : memref<64x128xf32, #tpu.memory_space<vmem>>, vector<64x128xf32>,
    %c0_8 = arith.constant 0 : index
    %c0_9 = arith.constant 0 : index
    %c0_10 = arith.constant 0 : index
    %8 = vector.load %arg5[%c0_8, %c0_9, %c0_10] : memref<2x32x128xf32, #tpu.memory_space<vmem>>, vector<1x32x128xf32>
    %9 = vector.shape_cast %8 : vector<1x32x128xf32> to vector<32x128xf32>
    %c0_11 = arith.constant 0 : index
    %c0_12 = arith.constant 0 : index
    %c0_13 = arith.constant 0 : index
    %10 = vector.load %arg1[%c0_11, %c0_12, %c0_13] : memref<2x8x32xf32, #tpu.memory_space<vmem>>, vector<1x8x32xf32>
    %11 = vector.shape_cast %10 : vector<1x8x32xf32> to vector<8x32xf32>
    %c0_14 = arith.constant 0 : index
    %c0_15 = arith.constant 0 : index
    %c0_16 = arith.constant 0 : index
    %12 = vector.load %arg2[%c0_14, %c0_15, %c0_16] : memref<2x8x32xf32, #tpu.memory_space<vmem>>, vector<1x8x32xf32>
    %13 = vector.shape_cast %12 : vector<1x8x32xf32> to vector<8x32xf32>
    %c0_i32 = arith.constant 0 : i32
    %c8_i32 = arith.constant 8 : i32
    %14 = arith.muli %c0_i32, %c8_i32 : i32
    %15 = tpu.assume_multiple %14, 8 : i32
    %16 = arith.index_cast %15 : i32 to index
    %c0_17 = arith.constant 0 : index
    %17 = vector.load %arg9[%16, %c0_17] : memref<64x128xf32, #tpu.memory_space<vmem>>, vector<8x128xf32>
    %cst_18 = arith.constant dense<0.000000e+00> : vector<8x128xf32>
    %18 = tpu.matmul %11, %9, %cst_18 {dimension_numbers = #tpu.dot_dimension_numbers<[1], [0], [0], [1], [0, 0, 1, 1], [], []>} : vector<8x32xf32>, vector<32x128xf32>, vector<8x128xf32> -> vector<8x128xf32>
    %19 = arith.addf %17, %18 : vector<8x128xf32>
    %20 = arith.negf %19 : vector<8x128xf32>
    %21 = math.exp %20 : vector<8x128xf32>
    %cst_19 = arith.constant 1.000000e+00 : f32
    %22 = vector.broadcast %cst_19 : f32 to vector<8x128xf32>
    %23 = arith.addf %22, %21 : vector<8x128xf32>
    %24 = arith.divf %22, %23 : vector<8x128xf32>
    %25 = math.tanh %19 : vector<8x128xf32>
    %26 = vector.extract_strided_slice %24 {offsets = [0, 0], sizes = [8, 32], strides = [1, 1]} : vector<8x128xf32> to vector<8x32xf32>
    %27 = vector.extract_strided_slice %24 {offsets = [0, 32], sizes = [8, 32], strides = [1, 1]} : vector<8x128xf32> to vector<8x32xf32>
    %28 = vector.extract_strided_slice %25 {offsets = [0, 64], sizes = [8, 32], strides = [1, 1]} : vector<8x128xf32> to vector<8x32xf32>
    %29 = vector.extract_strided_slice %24 {offsets = [0, 96], sizes = [8, 32], strides = [1, 1]} : vector<8x128xf32> to vector<8x32xf32>
    %30 = arith.mulf %27, %13 : vector<8x32xf32>
    %31 = arith.mulf %26, %28 : vector<8x32xf32>
    %32 = arith.addf %30, %31 : vector<8x32xf32>
    %33 = math.tanh %32 : vector<8x32xf32>
    %34 = arith.mulf %29, %33 : vector<8x32xf32>
    %35 = arith.index_cast %15 : i32 to index
    %c0_20 = arith.constant 0 : index
    %36 = vector.load %arg10[%35, %c0_20] : memref<64x32xf32, #tpu.memory_space<vmem>>, vector<8x32xf32>
    tpu.vector_store %arg10[%35, %c0_20], %34 {strides = array<i32>} : memref<64x32xf32, #tpu.memory_space<vmem>>, vector<8x32xf32>,
    %c1_i32 = arith.constant 1 : i32
    %c8_i32_21 = arith.constant 8 : i32
    %37 = arith.muli %c1_i32, %c8_i32_21 : i32
    %38 = tpu.assume_multiple %37, 8 : i32
    %39 = arith.index_cast %38 : i32 to index
    %c0_22 = arith.constant 0 : index
    %40 = vector.load %arg9[%39, %c0_22] : memref<64x128xf32, #tpu.memory_space<vmem>>, vector<8x128xf32>
    %cst_23 = arith.constant dense<0.000000e+00> : vector<8x128xf32>
    %41 = tpu.matmul %34, %9, %cst_23 {dimension_numbers = #tpu.dot_dimension_numbers<[1], [0], [0], [1], [0, 0, 1, 1], [], []>} : vector<8x32xf32>, vector<32x128xf32>, vector<8x128xf32> -> vector<8x128xf32>
    %42 = arith.addf %40, %41 : vector<8x128xf32>
    %43 = arith.negf %42 : vector<8x128xf32>
    %44 = math.exp %43 : vector<8x128xf32>
    %cst_24 = arith.constant 1.000000e+00 : f32
    %45 = vector.broadcast %cst_24 : f32 to vector<8x128xf32>
    %46 = arith.addf %45, %44 : vector<8x128xf32>
    %47 = arith.divf %45, %46 : vector<8x128xf32>
    %48 = math.tanh %42 : vector<8x128xf32>
    %49 = vector.extract_strided_slice %47 {offsets = [0, 0], sizes = [8, 32], strides = [1, 1]} : vector<8x128xf32> to vector<8x32xf32>
    %50 = vector.extract_strided_slice %47 {offsets = [0, 32], sizes = [8, 32], strides = [1, 1]} : vector<8x128xf32> to vector<8x32xf32>
    %51 = vector.extract_strided_slice %48 {offsets = [0, 64], sizes = [8, 32], strides = [1, 1]} : vector<8x128xf32> to vector<8x32xf32>
    %52 = vector.extract_strided_slice %47 {offsets = [0, 96], sizes = [8, 32], strides = [1, 1]} : vector<8x128xf32> to vector<8x32xf32>
    %53 = arith.mulf %50, %32 : vector<8x32xf32>
    %54 = arith.mulf %49, %51 : vector<8x32xf32>
    %55 = arith.addf %53, %54 : vector<8x32xf32>
    %56 = math.tanh %55 : vector<8x32xf32>
    %57 = arith.mulf %52, %56 : vector<8x32xf32>
    %58 = arith.index_cast %38 : i32 to index
    %c0_25 = arith.constant 0 : index
    %59 = vector.load %arg10[%58, %c0_25] : memref<64x32xf32, #tpu.memory_space<vmem>>, vector<8x32xf32>
    tpu.vector_store %arg10[%58, %c0_25], %57 {strides = array<i32>} : memref<64x32xf32, #tpu.memory_space<vmem>>, vector<8x32xf32>,
    %c2_i32 = arith.constant 2 : i32
    %c8_i32_26 = arith.constant 8 : i32
    %60 = arith.muli %c2_i32, %c8_i32_26 : i32
    %61 = tpu.assume_multiple %60, 8 : i32
    %62 = arith.index_cast %61 : i32 to index
    %c0_27 = arith.constant 0 : index
    %63 = vector.load %arg9[%62, %c0_27] : memref<64x128xf32, #tpu.memory_space<vmem>>, vector<8x128xf32>
    %cst_28 = arith.constant dense<0.000000e+00> : vector<8x128xf32>
    %64 = tpu.matmul %57, %9, %cst_28 {dimension_numbers = #tpu.dot_dimension_numbers<[1], [0], [0], [1], [0, 0, 1, 1], [], []>} : vector<8x32xf32>, vector<32x128xf32>, vector<8x128xf32> -> vector<8x128xf32>
    %65 = arith.addf %63, %64 : vector<8x128xf32>
    %66 = arith.negf %65 : vector<8x128xf32>
    %67 = math.exp %66 : vector<8x128xf32>
    %cst_29 = arith.constant 1.000000e+00 : f32
    %68 = vector.broadcast %cst_29 : f32 to vector<8x128xf32>
    %69 = arith.addf %68, %67 : vector<8x128xf32>
    %70 = arith.divf %68, %69 : vector<8x128xf32>
    %71 = math.tanh %65 : vector<8x128xf32>
    %72 = vector.extract_strided_slice %70 {offsets = [0, 0], sizes = [8, 32], strides = [1, 1]} : vector<8x128xf32> to vector<8x32xf32>
    %73 = vector.extract_strided_slice %70 {offsets = [0, 32], sizes = [8, 32], strides = [1, 1]} : vector<8x128xf32> to vector<8x32xf32>
    %74 = vector.extract_strided_slice %71 {offsets = [0, 64], sizes = [8, 32], strides = [1, 1]} : vector<8x128xf32> to vector<8x32xf32>
    %75 = vector.extract_strided_slice %70 {offsets = [0, 96], sizes = [8, 32], strides = [1, 1]} : vector<8x128xf32> to vector<8x32xf32>
    %76 = arith.mulf %73, %55 : vector<8x32xf32>
    %77 = arith.mulf %72, %74 : vector<8x32xf32>
    %78 = arith.addf %76, %77 : vector<8x32xf32>
    %79 = math.tanh %78 : vector<8x32xf32>
    %80 = arith.mulf %75, %79 : vector<8x32xf32>
    %81 = arith.index_cast %61 : i32 to index
    %c0_30 = arith.constant 0 : index
    %82 = vector.load %arg10[%81, %c0_30] : memref<64x32xf32, #tpu.memory_space<vmem>>, vector<8x32xf32>
    tpu.vector_store %arg10[%81, %c0_30], %80 {strides = array<i32>} : memref<64x32xf32, #tpu.memory_space<vmem>>, vector<8x32xf32>,
    %c3_i32 = arith.constant 3 : i32
    %c8_i32_31 = arith.constant 8 : i32
    %83 = arith.muli %c3_i32, %c8_i32_31 : i32
    %84 = tpu.assume_multiple %83, 8 : i32
    %85 = arith.index_cast %84 : i32 to index
    %c0_32 = arith.constant 0 : index
    %86 = vector.load %arg9[%85, %c0_32] : memref<64x128xf32, #tpu.memory_space<vmem>>, vector<8x128xf32>
    %cst_33 = arith.constant dense<0.000000e+00> : vector<8x128xf32>
    %87 = tpu.matmul %80, %9, %cst_33 {dimension_numbers = #tpu.dot_dimension_numbers<[1], [0], [0], [1], [0, 0, 1, 1], [], []>} : vector<8x32xf32>, vector<32x128xf32>, vector<8x128xf32> -> vector<8x128xf32>
    %88 = arith.addf %86, %87 : vector<8x128xf32>
    %89 = arith.negf %88 : vector<8x128xf32>
    %90 = math.exp %89 : vector<8x128xf32>
    %cst_34 = arith.constant 1.000000e+00 : f32
    %91 = vector.broadcast %cst_34 : f32 to vector<8x128xf32>
    %92 = arith.addf %91, %90 : vector<8x128xf32>
    %93 = arith.divf %91, %92 : vector<8x128xf32>
    %94 = math.tanh %88 : vector<8x128xf32>
    %95 = vector.extract_strided_slice %93 {offsets = [0, 0], sizes = [8, 32], strides = [1, 1]} : vector<8x128xf32> to vector<8x32xf32>
    %96 = vector.extract_strided_slice %93 {offsets = [0, 32], sizes = [8, 32], strides = [1, 1]} : vector<8x128xf32> to vector<8x32xf32>
    %97 = vector.extract_strided_slice %94 {offsets = [0, 64], sizes = [8, 32], strides = [1, 1]} : vector<8x128xf32> to vector<8x32xf32>
    %98 = vector.extract_strided_slice %93 {offsets = [0, 96], sizes = [8, 32], strides = [1, 1]} : vector<8x128xf32> to vector<8x32xf32>
    %99 = arith.mulf %96, %78 : vector<8x32xf32>
    %100 = arith.mulf %95, %97 : vector<8x32xf32>
    %101 = arith.addf %99, %100 : vector<8x32xf32>
    %102 = math.tanh %101 : vector<8x32xf32>
    %103 = arith.mulf %98, %102 : vector<8x32xf32>
    %104 = arith.index_cast %84 : i32 to index
    %c0_35 = arith.constant 0 : index
    %105 = vector.load %arg10[%104, %c0_35] : memref<64x32xf32, #tpu.memory_space<vmem>>, vector<8x32xf32>
    tpu.vector_store %arg10[%104, %c0_35], %103 {strides = array<i32>} : memref<64x32xf32, #tpu.memory_space<vmem>>, vector<8x32xf32>,
    %c4_i32 = arith.constant 4 : i32
    %c8_i32_36 = arith.constant 8 : i32
    %106 = arith.muli %c4_i32, %c8_i32_36 : i32
    %107 = tpu.assume_multiple %106, 8 : i32
    %108 = arith.index_cast %107 : i32 to index
    %c0_37 = arith.constant 0 : index
    %109 = vector.load %arg9[%108, %c0_37] : memref<64x128xf32, #tpu.memory_space<vmem>>, vector<8x128xf32>
    %cst_38 = arith.constant dense<0.000000e+00> : vector<8x128xf32>
    %110 = tpu.matmul %103, %9, %cst_38 {dimension_numbers = #tpu.dot_dimension_numbers<[1], [0], [0], [1], [0, 0, 1, 1], [], []>} : vector<8x32xf32>, vector<32x128xf32>, vector<8x128xf32> -> vector<8x128xf32>
    %111 = arith.addf %109, %110 : vector<8x128xf32>
    %112 = arith.negf %111 : vector<8x128xf32>
    %113 = math.exp %112 : vector<8x128xf32>
    %cst_39 = arith.constant 1.000000e+00 : f32
    %114 = vector.broadcast %cst_39 : f32 to vector<8x128xf32>
    %115 = arith.addf %114, %113 : vector<8x128xf32>
    %116 = arith.divf %114, %115 : vector<8x128xf32>
    %117 = math.tanh %111 : vector<8x128xf32>
    %118 = vector.extract_strided_slice %116 {offsets = [0, 0], sizes = [8, 32], strides = [1, 1]} : vector<8x128xf32> to vector<8x32xf32>
    %119 = vector.extract_strided_slice %116 {offsets = [0, 32], sizes = [8, 32], strides = [1, 1]} : vector<8x128xf32> to vector<8x32xf32>
    %120 = vector.extract_strided_slice %117 {offsets = [0, 64], sizes = [8, 32], strides = [1, 1]} : vector<8x128xf32> to vector<8x32xf32>
    %121 = vector.extract_strided_slice %116 {offsets = [0, 96], sizes = [8, 32], strides = [1, 1]} : vector<8x128xf32> to vector<8x32xf32>
    %122 = arith.mulf %119, %101 : vector<8x32xf32>
    %123 = arith.mulf %118, %120 : vector<8x32xf32>
    %124 = arith.addf %122, %123 : vector<8x32xf32>
    %125 = math.tanh %124 : vector<8x32xf32>
    %126 = arith.mulf %121, %125 : vector<8x32xf32>
    %127 = arith.index_cast %107 : i32 to index
    %c0_40 = arith.constant 0 : index
    %128 = vector.load %arg10[%127, %c0_40] : memref<64x32xf32, #tpu.memory_space<vmem>>, vector<8x32xf32>
    tpu.vector_store %arg10[%127, %c0_40], %126 {strides = array<i32>} : memref<64x32xf32, #tpu.memory_space<vmem>>, vector<8x32xf32>,
    %c5_i32 = arith.constant 5 : i32
    %c8_i32_41 = arith.constant 8 : i32
    %129 = arith.muli %c5_i32, %c8_i32_41 : i32
    %130 = tpu.assume_multiple %129, 8 : i32
    %131 = arith.index_cast %130 : i32 to index
    %c0_42 = arith.constant 0 : index
    %132 = vector.load %arg9[%131, %c0_42] : memref<64x128xf32, #tpu.memory_space<vmem>>, vector<8x128xf32>
    %cst_43 = arith.constant dense<0.000000e+00> : vector<8x128xf32>
    %133 = tpu.matmul %126, %9, %cst_43 {dimension_numbers = #tpu.dot_dimension_numbers<[1], [0], [0], [1], [0, 0, 1, 1], [], []>} : vector<8x32xf32>, vector<32x128xf32>, vector<8x128xf32> -> vector<8x128xf32>
    %134 = arith.addf %132, %133 : vector<8x128xf32>
    %135 = arith.negf %134 : vector<8x128xf32>
    %136 = math.exp %135 : vector<8x128xf32>
    %cst_44 = arith.constant 1.000000e+00 : f32
    %137 = vector.broadcast %cst_44 : f32 to vector<8x128xf32>
    %138 = arith.addf %137, %136 : vector<8x128xf32>
    %139 = arith.divf %137, %138 : vector<8x128xf32>
    %140 = math.tanh %134 : vector<8x128xf32>
    %141 = vector.extract_strided_slice %139 {offsets = [0, 0], sizes = [8, 32], strides = [1, 1]} : vector<8x128xf32> to vector<8x32xf32>
    %142 = vector.extract_strided_slice %139 {offsets = [0, 32], sizes = [8, 32], strides = [1, 1]} : vector<8x128xf32> to vector<8x32xf32>
    %143 = vector.extract_strided_slice %140 {offsets = [0, 64], sizes = [8, 32], strides = [1, 1]} : vector<8x128xf32> to vector<8x32xf32>
    %144 = vector.extract_strided_slice %139 {offsets = [0, 96], sizes = [8, 32], strides = [1, 1]} : vector<8x128xf32> to vector<8x32xf32>
    %145 = arith.mulf %142, %124 : vector<8x32xf32>
    %146 = arith.mulf %141, %143 : vector<8x32xf32>
    %147 = arith.addf %145, %146 : vector<8x32xf32>
    %148 = math.tanh %147 : vector<8x32xf32>
    %149 = arith.mulf %144, %148 : vector<8x32xf32>
    %150 = arith.index_cast %130 : i32 to index
    %c0_45 = arith.constant 0 : index
    %151 = vector.load %arg10[%150, %c0_45] : memref<64x32xf32, #tpu.memory_space<vmem>>, vector<8x32xf32>
    tpu.vector_store %arg10[%150, %c0_45], %149 {strides = array<i32>} : memref<64x32xf32, #tpu.memory_space<vmem>>, vector<8x32xf32>,
    %c6_i32 = arith.constant 6 : i32
    %c8_i32_46 = arith.constant 8 : i32
    %152 = arith.muli %c6_i32, %c8_i32_46 : i32
    %153 = tpu.assume_multiple %152, 8 : i32
    %154 = arith.index_cast %153 : i32 to index
    %c0_47 = arith.constant 0 : index
    %155 = vector.load %arg9[%154, %c0_47] : memref<64x128xf32, #tpu.memory_space<vmem>>, vector<8x128xf32>
    %cst_48 = arith.constant dense<0.000000e+00> : vector<8x128xf32>
    %156 = tpu.matmul %149, %9, %cst_48 {dimension_numbers = #tpu.dot_dimension_numbers<[1], [0], [0], [1], [0, 0, 1, 1], [], []>} : vector<8x32xf32>, vector<32x128xf32>, vector<8x128xf32> -> vector<8x128xf32>
    %157 = arith.addf %155, %156 : vector<8x128xf32>
    %158 = arith.negf %157 : vector<8x128xf32>
    %159 = math.exp %158 : vector<8x128xf32>
    %cst_49 = arith.constant 1.000000e+00 : f32
    %160 = vector.broadcast %cst_49 : f32 to vector<8x128xf32>
    %161 = arith.addf %160, %159 : vector<8x128xf32>
    %162 = arith.divf %160, %161 : vector<8x128xf32>
    %163 = math.tanh %157 : vector<8x128xf32>
    %164 = vector.extract_strided_slice %162 {offsets = [0, 0], sizes = [8, 32], strides = [1, 1]} : vector<8x128xf32> to vector<8x32xf32>
    %165 = vector.extract_strided_slice %162 {offsets = [0, 32], sizes = [8, 32], strides = [1, 1]} : vector<8x128xf32> to vector<8x32xf32>
    %166 = vector.extract_strided_slice %163 {offsets = [0, 64], sizes = [8, 32], strides = [1, 1]} : vector<8x128xf32> to vector<8x32xf32>
    %167 = vector.extract_strided_slice %162 {offsets = [0, 96], sizes = [8, 32], strides = [1, 1]} : vector<8x128xf32> to vector<8x32xf32>
    %168 = arith.mulf %165, %147 : vector<8x32xf32>
    %169 = arith.mulf %164, %166 : vector<8x32xf32>
    %170 = arith.addf %168, %169 : vector<8x32xf32>
    %171 = math.tanh %170 : vector<8x32xf32>
    %172 = arith.mulf %167, %171 : vector<8x32xf32>
    %173 = arith.index_cast %153 : i32 to index
    %c0_50 = arith.constant 0 : index
    %174 = vector.load %arg10[%173, %c0_50] : memref<64x32xf32, #tpu.memory_space<vmem>>, vector<8x32xf32>
    tpu.vector_store %arg10[%173, %c0_50], %172 {strides = array<i32>} : memref<64x32xf32, #tpu.memory_space<vmem>>, vector<8x32xf32>,
    %c7_i32 = arith.constant 7 : i32
    %c8_i32_51 = arith.constant 8 : i32
    %175 = arith.muli %c7_i32, %c8_i32_51 : i32
    %176 = tpu.assume_multiple %175, 8 : i32
    %177 = arith.index_cast %176 : i32 to index
    %c0_52 = arith.constant 0 : index
    %178 = vector.load %arg9[%177, %c0_52] : memref<64x128xf32, #tpu.memory_space<vmem>>, vector<8x128xf32>
    %cst_53 = arith.constant dense<0.000000e+00> : vector<8x128xf32>
    %179 = tpu.matmul %172, %9, %cst_53 {dimension_numbers = #tpu.dot_dimension_numbers<[1], [0], [0], [1], [0, 0, 1, 1], [], []>} : vector<8x32xf32>, vector<32x128xf32>, vector<8x128xf32> -> vector<8x128xf32>
    %180 = arith.addf %178, %179 : vector<8x128xf32>
    %181 = arith.negf %180 : vector<8x128xf32>
    %182 = math.exp %181 : vector<8x128xf32>
    %cst_54 = arith.constant 1.000000e+00 : f32
    %183 = vector.broadcast %cst_54 : f32 to vector<8x128xf32>
    %184 = arith.addf %183, %182 : vector<8x128xf32>
    %185 = arith.divf %183, %184 : vector<8x128xf32>
    %186 = math.tanh %180 : vector<8x128xf32>
    %187 = vector.extract_strided_slice %185 {offsets = [0, 0], sizes = [8, 32], strides = [1, 1]} : vector<8x128xf32> to vector<8x32xf32>
    %188 = vector.extract_strided_slice %185 {offsets = [0, 32], sizes = [8, 32], strides = [1, 1]} : vector<8x128xf32> to vector<8x32xf32>
    %189 = vector.extract_strided_slice %186 {offsets = [0, 64], sizes = [8, 32], strides = [1, 1]} : vector<8x128xf32> to vector<8x32xf32>
    %190 = vector.extract_strided_slice %185 {offsets = [0, 96], sizes = [8, 32], strides = [1, 1]} : vector<8x128xf32> to vector<8x32xf32>
    %191 = arith.mulf %188, %170 : vector<8x32xf32>
    %192 = arith.mulf %187, %189 : vector<8x32xf32>
    %193 = arith.addf %191, %192 : vector<8x32xf32>
    %194 = math.tanh %193 : vector<8x32xf32>
    %195 = arith.mulf %190, %194 : vector<8x32xf32>
    %196 = arith.index_cast %176 : i32 to index
    %c0_55 = arith.constant 0 : index
    %197 = vector.load %arg10[%196, %c0_55] : memref<64x32xf32, #tpu.memory_space<vmem>>, vector<8x32xf32>
    tpu.vector_store %arg10[%196, %c0_55], %195 {strides = array<i32>} : memref<64x32xf32, #tpu.memory_space<vmem>>, vector<8x32xf32>,
    %c8_i32_56 = arith.constant 8 : i32
    %c0_57 = arith.constant 0 : index
    %c0_58 = arith.constant 0 : index
    %c0_59 = arith.constant 0 : index
    %198 = vector.load %arg7[%c0_57, %c0_58, %c0_59] : memref<2x8x32xf32, #tpu.memory_space<vmem>>, vector<1x8x32xf32>
    %199 = vector.shape_cast %198 : vector<1x8x32xf32> to vector<8x32xf32>
    %200 = vector.shape_cast %195 : vector<8x32xf32> to vector<1x8x32xf32>
    tpu.vector_store %arg7[%c0_57, %c0_58, %c0_59], %200 {strides = array<i32>} : memref<2x8x32xf32, #tpu.memory_space<vmem>>, vector<1x8x32xf32>,
    %c0_60 = arith.constant 0 : index
    %c0_61 = arith.constant 0 : index
    %c0_62 = arith.constant 0 : index
    %201 = vector.load %arg8[%c0_60, %c0_61, %c0_62] : memref<2x8x32xf32, #tpu.memory_space<vmem>>, vector<1x8x32xf32>
    %202 = vector.shape_cast %201 : vector<1x8x32xf32> to vector<8x32xf32>
    %203 = vector.shape_cast %193 : vector<8x32xf32> to vector<1x8x32xf32>
    tpu.vector_store %arg8[%c0_60, %c0_61, %c0_62], %203 {strides = array<i32>} : memref<2x8x32xf32, #tpu.memory_space<vmem>>, vector<1x8x32xf32>,
    %c0_63 = arith.constant 0 : index
    %c0_64 = arith.constant 0 : index
    %204 = vector.load %arg10[%c0_63, %c0_64] : memref<64x32xf32, #tpu.memory_space<vmem>>, vector<64x32xf32>
    %c0_65 = arith.constant 0 : index
    %c0_66 = arith.constant 0 : index
    %c0_67 = arith.constant 0 : index
    %205 = vector.load %arg4[%c0_65, %c0_66, %c0_67] : memref<1x32x128xf32, #tpu.memory_space<vmem>>, vector<1x32x128xf32>
    %206 = vector.shape_cast %205 : vector<1x32x128xf32> to vector<32x128xf32>
    %cst_68 = arith.constant dense<0.000000e+00> : vector<64x128xf32>
    %207 = tpu.matmul %204, %206, %cst_68 {dimension_numbers = #tpu.dot_dimension_numbers<[1], [0], [0], [1], [0, 0, 1, 1], [], []>} : vector<64x32xf32>, vector<32x128xf32>, vector<64x128xf32> -> vector<64x128xf32>
    %c1 = arith.constant 1 : index
    %c0_69 = arith.constant 0 : index
    %c0_70 = arith.constant 0 : index
    %208 = vector.load %arg6[%c1, %c0_69, %c0_70] : memref<2x1x128xf32, #tpu.memory_space<vmem>>, vector<1x1x128xf32>
    %209 = vector.shape_cast %208 : vector<1x1x128xf32> to vector<1x128xf32>
    %210 = vector.broadcast %209 : vector<1x128xf32> to vector<64x128xf32>
    %211 = arith.addf %207, %210 : vector<64x128xf32>
    %c0_71 = arith.constant 0 : index
    %c0_72 = arith.constant 0 : index
    %212 = vector.load %arg9[%c0_71, %c0_72] : memref<64x128xf32, #tpu.memory_space<vmem>>, vector<64x128xf32>
    tpu.vector_store %arg9[%c0_71, %c0_72], %211 {strides = array<i32>} : memref<64x128xf32, #tpu.memory_space<vmem>>, vector<64x128xf32>,
    %c1_73 = arith.constant 1 : index
    %c0_74 = arith.constant 0 : index
    %c0_75 = arith.constant 0 : index
    %213 = vector.load %arg5[%c1_73, %c0_74, %c0_75] : memref<2x32x128xf32, #tpu.memory_space<vmem>>, vector<1x32x128xf32>
    %214 = vector.shape_cast %213 : vector<1x32x128xf32> to vector<32x128xf32>
    %c1_76 = arith.constant 1 : index
    %c0_77 = arith.constant 0 : index
    %c0_78 = arith.constant 0 : index
    %215 = vector.load %arg1[%c1_76, %c0_77, %c0_78] : memref<2x8x32xf32, #tpu.memory_space<vmem>>, vector<1x8x32xf32>
    %216 = vector.shape_cast %215 : vector<1x8x32xf32> to vector<8x32xf32>
    %c1_79 = arith.constant 1 : index
    %c0_80 = arith.constant 0 : index
    %c0_81 = arith.constant 0 : index
    %217 = vector.load %arg2[%c1_79, %c0_80, %c0_81] : memref<2x8x32xf32, #tpu.memory_space<vmem>>, vector<1x8x32xf32>
    %218 = vector.shape_cast %217 : vector<1x8x32xf32> to vector<8x32xf32>
    %c0_i32_82 = arith.constant 0 : i32
    %c8_i32_83 = arith.constant 8 : i32
    %219 = arith.muli %c0_i32_82, %c8_i32_83 : i32
    %220 = tpu.assume_multiple %219, 8 : i32
    %221 = arith.index_cast %220 : i32 to index
    %c0_84 = arith.constant 0 : index
    %222 = vector.load %arg9[%221, %c0_84] : memref<64x128xf32, #tpu.memory_space<vmem>>, vector<8x128xf32>
    %cst_85 = arith.constant dense<0.000000e+00> : vector<8x128xf32>
    %223 = tpu.matmul %216, %214, %cst_85 {dimension_numbers = #tpu.dot_dimension_numbers<[1], [0], [0], [1], [0, 0, 1, 1], [], []>} : vector<8x32xf32>, vector<32x128xf32>, vector<8x128xf32> -> vector<8x128xf32>
    %224 = arith.addf %222, %223 : vector<8x128xf32>
    %225 = arith.negf %224 : vector<8x128xf32>
    %226 = math.exp %225 : vector<8x128xf32>
    %cst_86 = arith.constant 1.000000e+00 : f32
    %227 = vector.broadcast %cst_86 : f32 to vector<8x128xf32>
    %228 = arith.addf %227, %226 : vector<8x128xf32>
    %229 = arith.divf %227, %228 : vector<8x128xf32>
    %230 = math.tanh %224 : vector<8x128xf32>
    %231 = vector.extract_strided_slice %229 {offsets = [0, 0], sizes = [8, 32], strides = [1, 1]} : vector<8x128xf32> to vector<8x32xf32>
    %232 = vector.extract_strided_slice %229 {offsets = [0, 32], sizes = [8, 32], strides = [1, 1]} : vector<8x128xf32> to vector<8x32xf32>
    %233 = vector.extract_strided_slice %230 {offsets = [0, 64], sizes = [8, 32], strides = [1, 1]} : vector<8x128xf32> to vector<8x32xf32>
    %234 = vector.extract_strided_slice %229 {offsets = [0, 96], sizes = [8, 32], strides = [1, 1]} : vector<8x128xf32> to vector<8x32xf32>
    %235 = arith.mulf %232, %218 : vector<8x32xf32>
    %236 = arith.mulf %231, %233 : vector<8x32xf32>
    %237 = arith.addf %235, %236 : vector<8x32xf32>
    %238 = math.tanh %237 : vector<8x32xf32>
    %239 = arith.mulf %234, %238 : vector<8x32xf32>
    %c1_i32_87 = arith.constant 1 : i32
    %c8_i32_88 = arith.constant 8 : i32
    %240 = arith.muli %c1_i32_87, %c8_i32_88 : i32
    %241 = tpu.assume_multiple %240, 8 : i32
    %242 = arith.index_cast %241 : i32 to index
    %c0_89 = arith.constant 0 : index
    %243 = vector.load %arg9[%242, %c0_89] : memref<64x128xf32, #tpu.memory_space<vmem>>, vector<8x128xf32>
    %cst_90 = arith.constant dense<0.000000e+00> : vector<8x128xf32>
    %244 = tpu.matmul %239, %214, %cst_90 {dimension_numbers = #tpu.dot_dimension_numbers<[1], [0], [0], [1], [0, 0, 1, 1], [], []>} : vector<8x32xf32>, vector<32x128xf32>, vector<8x128xf32> -> vector<8x128xf32>
    %245 = arith.addf %243, %244 : vector<8x128xf32>
    %246 = arith.negf %245 : vector<8x128xf32>
    %247 = math.exp %246 : vector<8x128xf32>
    %cst_91 = arith.constant 1.000000e+00 : f32
    %248 = vector.broadcast %cst_91 : f32 to vector<8x128xf32>
    %249 = arith.addf %248, %247 : vector<8x128xf32>
    %250 = arith.divf %248, %249 : vector<8x128xf32>
    %251 = math.tanh %245 : vector<8x128xf32>
    %252 = vector.extract_strided_slice %250 {offsets = [0, 0], sizes = [8, 32], strides = [1, 1]} : vector<8x128xf32> to vector<8x32xf32>
    %253 = vector.extract_strided_slice %250 {offsets = [0, 32], sizes = [8, 32], strides = [1, 1]} : vector<8x128xf32> to vector<8x32xf32>
    %254 = vector.extract_strided_slice %251 {offsets = [0, 64], sizes = [8, 32], strides = [1, 1]} : vector<8x128xf32> to vector<8x32xf32>
    %255 = vector.extract_strided_slice %250 {offsets = [0, 96], sizes = [8, 32], strides = [1, 1]} : vector<8x128xf32> to vector<8x32xf32>
    %256 = arith.mulf %253, %237 : vector<8x32xf32>
    %257 = arith.mulf %252, %254 : vector<8x32xf32>
    %258 = arith.addf %256, %257 : vector<8x32xf32>
    %259 = math.tanh %258 : vector<8x32xf32>
    %260 = arith.mulf %255, %259 : vector<8x32xf32>
    %c2_i32_92 = arith.constant 2 : i32
    %c8_i32_93 = arith.constant 8 : i32
    %261 = arith.muli %c2_i32_92, %c8_i32_93 : i32
    %262 = tpu.assume_multiple %261, 8 : i32
    %263 = arith.index_cast %262 : i32 to index
    %c0_94 = arith.constant 0 : index
    %264 = vector.load %arg9[%263, %c0_94] : memref<64x128xf32, #tpu.memory_space<vmem>>, vector<8x128xf32>
    %cst_95 = arith.constant dense<0.000000e+00> : vector<8x128xf32>
    %265 = tpu.matmul %260, %214, %cst_95 {dimension_numbers = #tpu.dot_dimension_numbers<[1], [0], [0], [1], [0, 0, 1, 1], [], []>} : vector<8x32xf32>, vector<32x128xf32>, vector<8x128xf32> -> vector<8x128xf32>
    %266 = arith.addf %264, %265 : vector<8x128xf32>
    %267 = arith.negf %266 : vector<8x128xf32>
    %268 = math.exp %267 : vector<8x128xf32>
    %cst_96 = arith.constant 1.000000e+00 : f32
    %269 = vector.broadcast %cst_96 : f32 to vector<8x128xf32>
    %270 = arith.addf %269, %268 : vector<8x128xf32>
    %271 = arith.divf %269, %270 : vector<8x128xf32>
    %272 = math.tanh %266 : vector<8x128xf32>
    %273 = vector.extract_strided_slice %271 {offsets = [0, 0], sizes = [8, 32], strides = [1, 1]} : vector<8x128xf32> to vector<8x32xf32>
    %274 = vector.extract_strided_slice %271 {offsets = [0, 32], sizes = [8, 32], strides = [1, 1]} : vector<8x128xf32> to vector<8x32xf32>
    %275 = vector.extract_strided_slice %272 {offsets = [0, 64], sizes = [8, 32], strides = [1, 1]} : vector<8x128xf32> to vector<8x32xf32>
    %276 = vector.extract_strided_slice %271 {offsets = [0, 96], sizes = [8, 32], strides = [1, 1]} : vector<8x128xf32> to vector<8x32xf32>
    %277 = arith.mulf %274, %258 : vector<8x32xf32>
    %278 = arith.mulf %273, %275 : vector<8x32xf32>
    %279 = arith.addf %277, %278 : vector<8x32xf32>
    %280 = math.tanh %279 : vector<8x32xf32>
    %281 = arith.mulf %276, %280 : vector<8x32xf32>
    %c3_i32_97 = arith.constant 3 : i32
    %c8_i32_98 = arith.constant 8 : i32
    %282 = arith.muli %c3_i32_97, %c8_i32_98 : i32
    %283 = tpu.assume_multiple %282, 8 : i32
    %284 = arith.index_cast %283 : i32 to index
    %c0_99 = arith.constant 0 : index
    %285 = vector.load %arg9[%284, %c0_99] : memref<64x128xf32, #tpu.memory_space<vmem>>, vector<8x128xf32>
    %cst_100 = arith.constant dense<0.000000e+00> : vector<8x128xf32>
    %286 = tpu.matmul %281, %214, %cst_100 {dimension_numbers = #tpu.dot_dimension_numbers<[1], [0], [0], [1], [0, 0, 1, 1], [], []>} : vector<8x32xf32>, vector<32x128xf32>, vector<8x128xf32> -> vector<8x128xf32>
    %287 = arith.addf %285, %286 : vector<8x128xf32>
    %288 = arith.negf %287 : vector<8x128xf32>
    %289 = math.exp %288 : vector<8x128xf32>
    %cst_101 = arith.constant 1.000000e+00 : f32
    %290 = vector.broadcast %cst_101 : f32 to vector<8x128xf32>
    %291 = arith.addf %290, %289 : vector<8x128xf32>
    %292 = arith.divf %290, %291 : vector<8x128xf32>
    %293 = math.tanh %287 : vector<8x128xf32>
    %294 = vector.extract_strided_slice %292 {offsets = [0, 0], sizes = [8, 32], strides = [1, 1]} : vector<8x128xf32> to vector<8x32xf32>
    %295 = vector.extract_strided_slice %292 {offsets = [0, 32], sizes = [8, 32], strides = [1, 1]} : vector<8x128xf32> to vector<8x32xf32>
    %296 = vector.extract_strided_slice %293 {offsets = [0, 64], sizes = [8, 32], strides = [1, 1]} : vector<8x128xf32> to vector<8x32xf32>
    %297 = vector.extract_strided_slice %292 {offsets = [0, 96], sizes = [8, 32], strides = [1, 1]} : vector<8x128xf32> to vector<8x32xf32>
    %298 = arith.mulf %295, %279 : vector<8x32xf32>
    %299 = arith.mulf %294, %296 : vector<8x32xf32>
    %300 = arith.addf %298, %299 : vector<8x32xf32>
    %301 = math.tanh %300 : vector<8x32xf32>
    %302 = arith.mulf %297, %301 : vector<8x32xf32>
    %c4_i32_102 = arith.constant 4 : i32
    %c8_i32_103 = arith.constant 8 : i32
    %303 = arith.muli %c4_i32_102, %c8_i32_103 : i32
    %304 = tpu.assume_multiple %303, 8 : i32
    %305 = arith.index_cast %304 : i32 to index
    %c0_104 = arith.constant 0 : index
    %306 = vector.load %arg9[%305, %c0_104] : memref<64x128xf32, #tpu.memory_space<vmem>>, vector<8x128xf32>
    %cst_105 = arith.constant dense<0.000000e+00> : vector<8x128xf32>
    %307 = tpu.matmul %302, %214, %cst_105 {dimension_numbers = #tpu.dot_dimension_numbers<[1], [0], [0], [1], [0, 0, 1, 1], [], []>} : vector<8x32xf32>, vector<32x128xf32>, vector<8x128xf32> -> vector<8x128xf32>
    %308 = arith.addf %306, %307 : vector<8x128xf32>
    %309 = arith.negf %308 : vector<8x128xf32>
    %310 = math.exp %309 : vector<8x128xf32>
    %cst_106 = arith.constant 1.000000e+00 : f32
    %311 = vector.broadcast %cst_106 : f32 to vector<8x128xf32>
    %312 = arith.addf %311, %310 : vector<8x128xf32>
    %313 = arith.divf %311, %312 : vector<8x128xf32>
    %314 = math.tanh %308 : vector<8x128xf32>
    %315 = vector.extract_strided_slice %313 {offsets = [0, 0], sizes = [8, 32], strides = [1, 1]} : vector<8x128xf32> to vector<8x32xf32>
    %316 = vector.extract_strided_slice %313 {offsets = [0, 32], sizes = [8, 32], strides = [1, 1]} : vector<8x128xf32> to vector<8x32xf32>
    %317 = vector.extract_strided_slice %314 {offsets = [0, 64], sizes = [8, 32], strides = [1, 1]} : vector<8x128xf32> to vector<8x32xf32>
    %318 = vector.extract_strided_slice %313 {offsets = [0, 96], sizes = [8, 32], strides = [1, 1]} : vector<8x128xf32> to vector<8x32xf32>
    %319 = arith.mulf %316, %300 : vector<8x32xf32>
    %320 = arith.mulf %315, %317 : vector<8x32xf32>
    %321 = arith.addf %319, %320 : vector<8x32xf32>
    %322 = math.tanh %321 : vector<8x32xf32>
    %323 = arith.mulf %318, %322 : vector<8x32xf32>
    %c5_i32_107 = arith.constant 5 : i32
    %c8_i32_108 = arith.constant 8 : i32
    %324 = arith.muli %c5_i32_107, %c8_i32_108 : i32
    %325 = tpu.assume_multiple %324, 8 : i32
    %326 = arith.index_cast %325 : i32 to index
    %c0_109 = arith.constant 0 : index
    %327 = vector.load %arg9[%326, %c0_109] : memref<64x128xf32, #tpu.memory_space<vmem>>, vector<8x128xf32>
    %cst_110 = arith.constant dense<0.000000e+00> : vector<8x128xf32>
    %328 = tpu.matmul %323, %214, %cst_110 {dimension_numbers = #tpu.dot_dimension_numbers<[1], [0], [0], [1], [0, 0, 1, 1], [], []>} : vector<8x32xf32>, vector<32x128xf32>, vector<8x128xf32> -> vector<8x128xf32>
    %329 = arith.addf %327, %328 : vector<8x128xf32>
    %330 = arith.negf %329 : vector<8x128xf32>
    %331 = math.exp %330 : vector<8x128xf32>
    %cst_111 = arith.constant 1.000000e+00 : f32
    %332 = vector.broadcast %cst_111 : f32 to vector<8x128xf32>
    %333 = arith.addf %332, %331 : vector<8x128xf32>
    %334 = arith.divf %332, %333 : vector<8x128xf32>
    %335 = math.tanh %329 : vector<8x128xf32>
    %336 = vector.extract_strided_slice %334 {offsets = [0, 0], sizes = [8, 32], strides = [1, 1]} : vector<8x128xf32> to vector<8x32xf32>
    %337 = vector.extract_strided_slice %334 {offsets = [0, 32], sizes = [8, 32], strides = [1, 1]} : vector<8x128xf32> to vector<8x32xf32>
    %338 = vector.extract_strided_slice %335 {offsets = [0, 64], sizes = [8, 32], strides = [1, 1]} : vector<8x128xf32> to vector<8x32xf32>
    %339 = vector.extract_strided_slice %334 {offsets = [0, 96], sizes = [8, 32], strides = [1, 1]} : vector<8x128xf32> to vector<8x32xf32>
    %340 = arith.mulf %337, %321 : vector<8x32xf32>
    %341 = arith.mulf %336, %338 : vector<8x32xf32>
    %342 = arith.addf %340, %341 : vector<8x32xf32>
    %343 = math.tanh %342 : vector<8x32xf32>
    %344 = arith.mulf %339, %343 : vector<8x32xf32>
    %c6_i32_112 = arith.constant 6 : i32
    %c8_i32_113 = arith.constant 8 : i32
    %345 = arith.muli %c6_i32_112, %c8_i32_113 : i32
    %346 = tpu.assume_multiple %345, 8 : i32
    %347 = arith.index_cast %346 : i32 to index
    %c0_114 = arith.constant 0 : index
    %348 = vector.load %arg9[%347, %c0_114] : memref<64x128xf32, #tpu.memory_space<vmem>>, vector<8x128xf32>
    %cst_115 = arith.constant dense<0.000000e+00> : vector<8x128xf32>
    %349 = tpu.matmul %344, %214, %cst_115 {dimension_numbers = #tpu.dot_dimension_numbers<[1], [0], [0], [1], [0, 0, 1, 1], [], []>} : vector<8x32xf32>, vector<32x128xf32>, vector<8x128xf32> -> vector<8x128xf32>
    %350 = arith.addf %348, %349 : vector<8x128xf32>
    %351 = arith.negf %350 : vector<8x128xf32>
    %352 = math.exp %351 : vector<8x128xf32>
    %cst_116 = arith.constant 1.000000e+00 : f32
    %353 = vector.broadcast %cst_116 : f32 to vector<8x128xf32>
    %354 = arith.addf %353, %352 : vector<8x128xf32>
    %355 = arith.divf %353, %354 : vector<8x128xf32>
    %356 = math.tanh %350 : vector<8x128xf32>
    %357 = vector.extract_strided_slice %355 {offsets = [0, 0], sizes = [8, 32], strides = [1, 1]} : vector<8x128xf32> to vector<8x32xf32>
    %358 = vector.extract_strided_slice %355 {offsets = [0, 32], sizes = [8, 32], strides = [1, 1]} : vector<8x128xf32> to vector<8x32xf32>
    %359 = vector.extract_strided_slice %356 {offsets = [0, 64], sizes = [8, 32], strides = [1, 1]} : vector<8x128xf32> to vector<8x32xf32>
    %360 = vector.extract_strided_slice %355 {offsets = [0, 96], sizes = [8, 32], strides = [1, 1]} : vector<8x128xf32> to vector<8x32xf32>
    %361 = arith.mulf %358, %342 : vector<8x32xf32>
    %362 = arith.mulf %357, %359 : vector<8x32xf32>
    %363 = arith.addf %361, %362 : vector<8x32xf32>
    %364 = math.tanh %363 : vector<8x32xf32>
    %365 = arith.mulf %360, %364 : vector<8x32xf32>
    %c7_i32_117 = arith.constant 7 : i32
    %c8_i32_118 = arith.constant 8 : i32
    %366 = arith.muli %c7_i32_117, %c8_i32_118 : i32
    %367 = tpu.assume_multiple %366, 8 : i32
    %368 = arith.index_cast %367 : i32 to index
    %c0_119 = arith.constant 0 : index
    %369 = vector.load %arg9[%368, %c0_119] : memref<64x128xf32, #tpu.memory_space<vmem>>, vector<8x128xf32>
    %cst_120 = arith.constant dense<0.000000e+00> : vector<8x128xf32>
    %370 = tpu.matmul %365, %214, %cst_120 {dimension_numbers = #tpu.dot_dimension_numbers<[1], [0], [0], [1], [0, 0, 1, 1], [], []>} : vector<8x32xf32>, vector<32x128xf32>, vector<8x128xf32> -> vector<8x128xf32>
    %371 = arith.addf %369, %370 : vector<8x128xf32>
    %372 = arith.negf %371 : vector<8x128xf32>
    %373 = math.exp %372 : vector<8x128xf32>
    %cst_121 = arith.constant 1.000000e+00 : f32
    %374 = vector.broadcast %cst_121 : f32 to vector<8x128xf32>
    %375 = arith.addf %374, %373 : vector<8x128xf32>
    %376 = arith.divf %374, %375 : vector<8x128xf32>
    %377 = math.tanh %371 : vector<8x128xf32>
    %378 = vector.extract_strided_slice %376 {offsets = [0, 0], sizes = [8, 32], strides = [1, 1]} : vector<8x128xf32> to vector<8x32xf32>
    %379 = vector.extract_strided_slice %376 {offsets = [0, 32], sizes = [8, 32], strides = [1, 1]} : vector<8x128xf32> to vector<8x32xf32>
    %380 = vector.extract_strided_slice %377 {offsets = [0, 64], sizes = [8, 32], strides = [1, 1]} : vector<8x128xf32> to vector<8x32xf32>
    %381 = vector.extract_strided_slice %376 {offsets = [0, 96], sizes = [8, 32], strides = [1, 1]} : vector<8x128xf32> to vector<8x32xf32>
    %382 = arith.mulf %379, %363 : vector<8x32xf32>
    %383 = arith.mulf %378, %380 : vector<8x32xf32>
    %384 = arith.addf %382, %383 : vector<8x32xf32>
    %385 = math.tanh %384 : vector<8x32xf32>
    %386 = arith.mulf %381, %385 : vector<8x32xf32>
    %c8_i32_122 = arith.constant 8 : i32
    %c1_123 = arith.constant 1 : index
    %c0_124 = arith.constant 0 : index
    %c0_125 = arith.constant 0 : index
    %387 = vector.load %arg7[%c1_123, %c0_124, %c0_125] : memref<2x8x32xf32, #tpu.memory_space<vmem>>, vector<1x8x32xf32>
    %388 = vector.shape_cast %387 : vector<1x8x32xf32> to vector<8x32xf32>
    %389 = vector.shape_cast %386 : vector<8x32xf32> to vector<1x8x32xf32>
    tpu.vector_store %arg7[%c1_123, %c0_124, %c0_125], %389 {strides = array<i32>} : memref<2x8x32xf32, #tpu.memory_space<vmem>>, vector<1x8x32xf32>,
    %c1_126 = arith.constant 1 : index
    %c0_127 = arith.constant 0 : index
    %c0_128 = arith.constant 0 : index
    %390 = vector.load %arg8[%c1_126, %c0_127, %c0_128] : memref<2x8x32xf32, #tpu.memory_space<vmem>>, vector<1x8x32xf32>
    %391 = vector.shape_cast %390 : vector<1x8x32xf32> to vector<8x32xf32>
    %392 = vector.shape_cast %384 : vector<8x32xf32> to vector<1x8x32xf32>
    tpu.vector_store %arg8[%c1_126, %c0_127, %c0_128], %392 {strides = array<i32>} : memref<2x8x32xf32, #tpu.memory_space<vmem>>, vector<1x8x32xf32>,
    return
  }
}

</mosaic_0001>

<llo_original>
// kernel: tpu_custom_call.1
$region0: #{tpu_custom_call.1}
  #allocation0 [shape = 'u32[]', space=smem, size = 0x4, offset = 0x4, fixed_abs, tag = 'smem constant byte address 0x4 - core index']
  #allocation1 [shape = 'u32[72,128]{1,0:T(1,128)}', space=vmem, size = 0x9000, scoped, tag = 'internal scratch']
  #allocation2 [shape = 'f32[64,128]{1,0:T(8,128)}', space=vmem, size = 0x8000, scoped, tag = 'scratch operand']
  #allocation3 [shape = 'f32[64,32]{1,0:T(8,128)}', space=vmem, size = 0x8000, scoped, tag = 'scratch operand']
  %s0 = inlined_call_operand.hbm [shape: f32[64,64], index: 0, kind: input, shape index: {}]
  %s1 = inlined_call_operand.hbm [shape: f32[2,8,32], index: 1, kind: input, shape index: {}]
  %s2 = inlined_call_operand.hbm [shape: f32[2,8,32], index: 2, kind: input, shape index: {}]
  %s3 = inlined_call_operand.hbm [shape: f32[64,128], index: 3, kind: input, shape index: {}]
  %s4 = inlined_call_operand.hbm [shape: f32[1,32,128], index: 4, kind: input, shape index: {}]
  %s5 = inlined_call_operand.hbm [shape: f32[2,32,128], index: 5, kind: input, shape index: {}]
  %s6 = inlined_call_operand.vmem [shape: f32[2,1,128], index: 6, kind: input, shape index: {}]
  %s7 = inlined_call_operand.hbm [shape: f32[2,8,32], index: 7, kind: output, shape index: {0}]
  %s8 = inlined_call_operand.hbm [shape: f32[2,8,32], index: 8, kind: output, shape index: {1}]
  %9 = xla_tuple %s7, %s8
  %s10 = sld [smem:[#allocation0]]
  $region70: #{tpu_custom_call.1} parent=0
    _
  %s12 = ssub.s32 1, %s10
  %s13 = scalar_select 0, %s12, %s10
  $region1: #{tpu_custom_call.1} parent=0
    #allocation4 [shape = 'u8[32768]{0}', space=vmem, size = 0x8000, scoped, tag = 'input window, operand 0, single buffered']
    #allocation5 [shape = 's32[1]{0}', space=sflag, size = 0x4, scoped, tag = 'scoped memory for tpu_custom_call.1']
    #allocation6 [shape = 's32[1]{0}', space=sflag, size = 0x4, scoped, tag = 'scoped memory for tpu_custom_call.1']
    #allocation7 [shape = 'u8[8192]{0}', space=vmem, size = 0x2000, scoped, tag = 'input window, operand 1, single buffered']
    #allocation8 [shape = 's32[1]{0}', space=sflag, size = 0x4, scoped, tag = 'scoped memory for tpu_custom_call.1']
    #allocation9 [shape = 'u8[8192]{0}', space=vmem, size = 0x2000, scoped, tag = 'input window, operand 2, single buffered']
    #allocation10 [shape = 'u8[32768]{0}', space=vmem, size = 0x8000, scoped, tag = 'input window, operand 3, single buffered']
    #allocation11 [shape = 's32[1]{0}', space=sflag, size = 0x4, scoped, tag = 'scoped memory for tpu_custom_call.1']
    #allocation12 [shape = 'u8[16384]{0}', space=vmem, size = 0x4000, scoped, tag = 'input window, operand 4, single buffered']
    #allocation13 [shape = 'u8[32768]{0}', space=vmem, size = 0x8000, scoped, tag = 'input window, operand 5, single buffered']
    #allocation14 [shape = 's32[1]{0}', space=sflag, size = 0x4, scoped, tag = 'scoped memory for tpu_custom_call.1']
    #allocation15 [shape = 'u8[8192]{0}', space=vmem, size = 0x2000, scoped, tag = 'output window, operand 0, single buffered']
    #allocation16 [shape = 'u8[8192]{0}', space=vmem, size = 0x2000, scoped, tag = 'output window, operand 1, single buffered']
    #allocation17 [shape = 's32[1]{0}', space=sflag, size = 0x4, scoped, tag = 'scoped memory for tpu_custom_call.1']
    %14 = vsyncpa [#allocation5], 0
    %15 = vsyncpa [#allocation8], 0
    %16 = vsyncpa [#allocation11], 0
    %17 = vsyncpa [#allocation14], 0
    %18 = vsyncpa [#allocation6], 0
    %19 = vsyncpa [#allocation17], 0
    // Predicated region
    $region2: #{tpu_custom_call.1} parent=1 // pred_check
      _
    $region3: #{tpu_custom_call.1} parent=1 // pred_check_branch
      %21 = sbr.rel (0) target = $region5
    $region4: #{tpu_custom_call.1} parent=1 // pred_region
      %23 = vsyncadd [#allocation5], 0
      %s24 = sshll.u32 %s0, 4
      %s25 = int_to_ptr.hbm [resolvable:$true] %s24
      %s26 = sshll.u32 [#allocation4], 4
      %s27 = int_to_ptr.vmem [resolvable:$true] %s26
      %32 = dma.hbm_to_vmem [thread:$0]  %s25, 1024, %s27, [#allocation5], 128, 128, 8
    $region5: #{tpu_custom_call.1} parent=1 // pred_fallthru
      _
    // Predicated region
    $region6: #{tpu_custom_call.1} parent=1 // pred_check
      _
    $region7: #{tpu_custom_call.1} parent=1 // pred_check_branch
      %34 = sbr.rel (0) target = $region9
    $region8: #{tpu_custom_call.1} parent=1 // pred_region
      %36 = vsyncadd [#allocation8], 0
      %s37 = sshll.u32 %s1, 4
      %s38 = int_to_ptr.hbm [resolvable:$true] %s37
      %s39 = sshll.u32 [#allocation7], 4
      %s40 = int_to_ptr.vmem [resolvable:$true] %s39
      %45 = dma.hbm_to_vmem [thread:$0]  %s38, 256, %s40, [#allocation8], 128, 128, 8
    $region9: #{tpu_custom_call.1} parent=1 // pred_fallthru
      _
    // Predicated region
    $region10: #{tpu_custom_call.1} parent=1 // pred_check
      _
    $region11: #{tpu_custom_call.1} parent=1 // pred_check_branch
      %47 = sbr.rel (0) target = $region13
    $region12: #{tpu_custom_call.1} parent=1 // pred_region
      %49 = vsyncadd [#allocation8], 0
      %s50 = sshll.u32 %s2, 4
      %s51 = int_to_ptr.hbm [resolvable:$true] %s50
      %s52 = sshll.u32 [#allocation9], 4
      %s53 = int_to_ptr.vmem [resolvable:$true] %s52
      %58 = dma.hbm_to_vmem [thread:$0]  %s51, 256, %s53, [#allocation8], 128, 128, 8
    $region13: #{tpu_custom_call.1} parent=1 // pred_fallthru
      _
    // Predicated region
    $region14: #{tpu_custom_call.1} parent=1 // pred_check
      _
    $region15: #{tpu_custom_call.1} parent=1 // pred_check_branch
      %60 = sbr.rel (0) target = $region17
    $region16: #{tpu_custom_call.1} parent=1 // pred_region
      %62 = vsyncadd [#allocation11], 0
      %s63 = sshll.u32 %s3, 4
      %s64 = int_to_ptr.hbm [resolvable:$true] %s63
      %s65 = sshll.u32 [#allocation10], 4
      %s66 = int_to_ptr.vmem [resolvable:$true] %s65
      %71 = dma.hbm_to_vmem [thread:$0]  %s64, 1024, %s66, [#allocation11], 128, 128, 8
    $region17: #{tpu_custom_call.1} parent=1 // pred_fallthru
      _
    // Predicated region
    $region18: #{tpu_custom_call.1} parent=1 // pred_check
      _
    $region19: #{tpu_custom_call.1} parent=1 // pred_check_branch
      %73 = sbr.rel (0) target = $region21
    $region20: #{tpu_custom_call.1} parent=1 // pred_region
      %75 = vsyncadd [#allocation11], 0
      %s76 = sshll.u32 %s4, 4
      %s77 = int_to_ptr.hbm [resolvable:$true] %s76
      %s78 = sshll.u32 [#allocation12], 4
      %s79 = int_to_ptr.vmem [resolvable:$true] %s78
      %84 = dma.hbm_to_vmem [thread:$0]  %s77, 512, %s79, [#allocation11], 128, 128, 8
    $region21: #{tpu_custom_call.1} parent=1 // pred_fallthru
      _
    // Predicated region
    $region22: #{tpu_custom_call.1} parent=1 // pred_check
      _
    $region23: #{tpu_custom_call.1} parent=1 // pred_check_branch
      %86 = sbr.rel (0) target = $region25
    $region24: #{tpu_custom_call.1} parent=1 // pred_region
      %88 = vsyncadd [#allocation14], 0
      %s89 = sshll.u32 %s5, 4
      %s90 = int_to_ptr.hbm [resolvable:$true] %s89
      %s91 = sshll.u32 [#allocation13], 4
      %s92 = int_to_ptr.vmem [resolvable:$true] %s91
      %97 = dma.hbm_to_vmem [thread:$0]  %s90, 1024, %s92, [#allocation14], 128, 128, 8
    $region25: #{tpu_custom_call.1} parent=1 // pred_fallthru
      _
    // Predicated region
    $region26: #{tpu_custom_call.1} parent=1 // pred_check
      _
    $region27: #{tpu_custom_call.1} parent=1 // pred_check_branch
      %99 = sbr.rel (0) target = $region29
    $region28: #{tpu_custom_call.1} parent=1 // pred_region
      _
    $region29: #{tpu_custom_call.1} parent=1 // pred_fallthru
      _
    // Predicated region
    $region30: #{tpu_custom_call.1} parent=1 // pred_check
      _
    $region31: #{tpu_custom_call.1} parent=1 // pred_check_branch
      %101 = sbr.rel (0) target = $region33
    $region32: #{tpu_custom_call.1} parent=1 // pred_region
      %103 = dma.done [#allocation5], 1024
    $region33: #{tpu_custom_call.1} parent=1 // pred_fallthru
      _
    // Predicated region
    $region34: #{tpu_custom_call.1} parent=1 // pred_check
      _
    $region35: #{tpu_custom_call.1} parent=1 // pred_check_branch
      %105 = sbr.rel (0) target = $region37
    $region36: #{tpu_custom_call.1} parent=1 // pred_region
      %107 = dma.done [#allocation8], 256
    $region37: #{tpu_custom_call.1} parent=1 // pred_fallthru
      _
    // Predicated region
    $region38: #{tpu_custom_call.1} parent=1 // pred_check
      _
    $region39: #{tpu_custom_call.1} parent=1 // pred_check_branch
      %109 = sbr.rel (0) target = $region41
    $region40: #{tpu_custom_call.1} parent=1 // pred_region
      %111 = dma.done [#allocation8], 256
    $region41: #{tpu_custom_call.1} parent=1 // pred_fallthru
      _
    // Predicated region
    $region42: #{tpu_custom_call.1} parent=1 // pred_check
      _
    $region43: #{tpu_custom_call.1} parent=1 // pred_check_branch
      %113 = sbr.rel (0) target = $region45
    $region44: #{tpu_custom_call.1} parent=1 // pred_region
      %115 = dma.done [#allocation11], 1024
    $region45: #{tpu_custom_call.1} parent=1 // pred_fallthru
      _
    // Predicated region
    $region46: #{tpu_custom_call.1} parent=1 // pred_check
      _
    $region47: #{tpu_custom_call.1} parent=1 // pred_check_branch
      %117 = sbr.rel (0) target = $region49
    $region48: #{tpu_custom_call.1} parent=1 // pred_region
      %119 = dma.done [#allocation11], 512
    $region49: #{tpu_custom_call.1} parent=1 // pred_fallthru
      _
    // Predicated region
    $region50: #{tpu_custom_call.1} parent=1 // pred_check
      _
    $region51: #{tpu_custom_call.1} parent=1 // pred_check_branch
      %121 = sbr.rel (0) target = $region53
    $region52: #{tpu_custom_call.1} parent=1 // pred_region
      %123 = dma.done [#allocation14], 1024
    $region53: #{tpu_custom_call.1} parent=1 // pred_fallthru
      _
    %v124 = vld [vmem:[#allocation4] sm:$0xff]
    %v125 = vld [vmem:[#allocation4 + $0x8] sm:$0xff]
    %v126 = vld [vmem:[#allocation4 + $0x10] sm:$0xff]
    %v127 = vld [vmem:[#allocation4 + $0x18] sm:$0xff]
    %v128 = vld [vmem:[#allocation4 + $0x20] sm:$0xff]
    %v129 = vld [vmem:[#allocation4 + $0x28] sm:$0xff]
    %v130 = vld [vmem:[#allocation4 + $0x30] sm:$0xff]
    %v131 = vld [vmem:[#allocation4 + $0x38] sm:$0xff]
    %v132 = vld [vmem:[#allocation10] sm:$0xff]
    %v133 = vld [vmem:[#allocation10 + $0x8] sm:$0xff]
    %v134 = vld [vmem:[#allocation10 + $0x10] sm:$0xff]
    %v135 = vld [vmem:[#allocation10 + $0x18] sm:$0xff]
    %v136 = vld [vmem:[#allocation10 + $0x20] sm:$0xff]
    %v137 = vld [vmem:[#allocation10 + $0x28] sm:$0xff]
    %v138 = vld [vmem:[#allocation10 + $0x30] sm:$0xff]
    %v139 = vld [vmem:[#allocation10 + $0x38] sm:$0xff]
    %v140 = vld [vmem:[%s6] sm:$0x1]
    %v142 = vperm.slane %v140, 0
    %vm144 = vcmask 523264
    %v146 = vsel %vm144, %v124, 0
    %v149 = vsel %vm144, %v125, 0
    %v152 = vsel %vm144, %v126, 0
    %v155 = vsel %vm144, %v127, 0
    %v158 = vsel %vm144, %v128, 0
    %v161 = vsel %vm144, %v129, 0
    %v164 = vsel %vm144, %v130, 0
    %v167 = vsel %vm144, %v131, 0
    %169 = vmatpush.msra.mxu0 0.0
    %170 = vmatpush.msra.mxu0 0.0
    %171 = vmatpush.msra.mxu0 0.0
    %172 = vmatpush.msra.mxu0 0.0
    %173 = vmatpush.msra.mxu0 0.0
    %174 = vmatpush.msra.mxu0 0.0
    %175 = vmatpush.msra.mxu0 0.0
    %176 = vmatpush.msra.mxu0 0.0
    %177 = vmatpush.msra.mxu0 %v139
    %178 = vmatpush.msra.mxu0 %v138
    %179 = vmatpush.msra.mxu0 %v137
    %180 = vmatpush.msra.mxu0 %v136
    %181 = vmatpush.msra.mxu0 %v135
    %182 = vmatpush.msra.mxu0 %v134
    %183 = vmatpush.msra.mxu0 %v133
    %184 = vmatpush.msra.mxu0 %v132
    %185 = vmatmul.f32.gmra.mxu0 %v146
    %v186 = vpop.f32.mrf.mxu0
    %v187 = vadd.f32 %v142, %v186
    %188 = vmatmul.f32.gmra.mxu0 %v149
    %v189 = vpop.f32.mrf.mxu0
    %v190 = vadd.f32 %v142, %v189
    %191 = vmatmul.f32.gmra.mxu0 %v152
    %v192 = vpop.f32.mrf.mxu0
    %v193 = vadd.f32 %v142, %v192
    %194 = vmatmul.f32.gmra.mxu0 %v155
    %v195 = vpop.f32.mrf.mxu0
    %v196 = vadd.f32 %v142, %v195
    %197 = vmatmul.f32.gmra.mxu0 %v158
    %v198 = vpop.f32.mrf.mxu0
    %v199 = vadd.f32 %v142, %v198
    %200 = vmatmul.f32.gmra.mxu0 %v161
    %v201 = vpop.f32.mrf.mxu0
    %v202 = vadd.f32 %v142, %v201
    %203 = vmatmul.f32.gmra.mxu0 %v164
    %v204 = vpop.f32.mrf.mxu0
    %v205 = vadd.f32 %v142, %v204
    %206 = vmatmul.f32.gmra.mxu0 %v167
    %v207 = vpop.f32.mrf.mxu0
    %v208 = vadd.f32 %v142, %v207
    %209 = vdwg.mxu0
    %210 = vst [vmem:[#allocation2] sm:$0xff] %v187
    %211 = vst [vmem:[#allocation2 + $0x8] sm:$0xff] %v190
    %212 = vst [vmem:[#allocation2 + $0x10] sm:$0xff] %v193
    %213 = vst [vmem:[#allocation2 + $0x18] sm:$0xff] %v196
    %214 = vst [vmem:[#allocation2 + $0x20] sm:$0xff] %v199
    %215 = vst [vmem:[#allocation2 + $0x28] sm:$0xff] %v202
    %216 = vst [vmem:[#allocation2 + $0x30] sm:$0xff] %v205
    %217 = vst [vmem:[#allocation2 + $0x38] sm:$0xff] %v208
    %v218 = vld [vmem:[#allocation13] sm:$0xff]
    %v219 = vld [vmem:[#allocation13 + $0x8] sm:$0xff]
    %v220 = vld [vmem:[#allocation13 + $0x10] sm:$0xff]
    %v221 = vld [vmem:[#allocation13 + $0x18] sm:$0xff]
    %v222 = vld [vmem:[#allocation7] sm:$0xff]
    %v223 = vld [vmem:[#allocation9] sm:$0xff]
    %v224 = vld [vmem:[#allocation2] sm:$0xff]
    %vm225 = vcmask 261120
    %v227 = vsel %vm225, %v222, 0
    %229 = vmatpush.msra.mxu0 0.0
    %230 = vmatpush.msra.mxu0 0.0
    %231 = vmatpush.msra.mxu0 0.0
    %232 = vmatpush.msra.mxu0 0.0
    %233 = vmatpush.msra.mxu0 0.0
    %234 = vmatpush.msra.mxu0 0.0
    %235 = vmatpush.msra.mxu0 0.0
    %236 = vmatpush.msra.mxu0 0.0
    %237 = vmatpush.msra.mxu0 0.0
    %238 = vmatpush.msra.mxu0 0.0
    %239 = vmatpush.msra.mxu0 0.0
    %240 = vmatpush.msra.mxu0 0.0
    %241 = vmatpush.msra.mxu0 %v221
    %242 = vmatpush.msra.mxu0 %v220
    %243 = vmatpush.msra.mxu0 %v219
    %244 = vmatpush.msra.mxu0 %v218
    %245 = vmatmul.f32.gmra.mxu0 %v227
    %v246 = vpop.f32.mrf.mxu0
    %v247 = vadd.f32 0.0, %v246
    %248 = vdwg.mxu0
    %v249 = vadd.f32 %v224, %v247
    %v250 = vxor.u32 %v249, 2147483648
    %v251 = vmul.f32 %v250, 1.442695
    %v252 = vpow.pop %v251
    %v253 = vadd.f32 %v252, 1.0
    %v254 = vrcp.pop %v253
    %v255 = vmul.f32 %v253, %v254
    %v256 = vsub.f32 1.0, %v255
    %v257 = vmul.f32 %v254, %v256
    %v258 = vadd.f32 %v254, %v257
    %vm259 = vweird.f32 %v253
    %vm260 = vweird.f32 %v254
    %vm261 = vmor %vm259, %vm260
    %v262 = vsel %vm261, %v254, %v258
    %v263 = vand.u32 2147483647, %v253
    %vm264 = vcmp.eq.f32.partialorder %v263, 8.507059e+37
    %v265 = vand.u32 %v253, 2147483648
    %v266 = vor.u32 1.1754944e-38, %v265
    %v267 = vsel %vm264, %v266, %v262
    %v268 = vmul.f32 1.0, %v267
    %v269 = vtanh.pop %v249
    %271 = vrot.lane.b32.xlu0 %v223, 32
    %v272 = vpop.permute.xlu0 %271
    %v274 = vmul.f32 %v268, %v272
    %276 = vrot.lane.b32.xlu0 %v269, 64
    %v277 = vpop.permute.xlu0 %276
    %v279 = vmul.f32 %v268, %v277
    %281 = vrot.lane.b32.xlu0 %v279, 32
    %v282 = vpop.permute.xlu0 %281
    %v284 = vadd.f32 %v274, %v282
    %v285 = vtanh.pop %v284
    %287 = vrot.lane.b32.xlu0 %v285, 64
    %v288 = vpop.permute.xlu0 %287
    %v290 = vmul.f32 %v268, %v288
    %292 = vrot.lane.b32.xlu0 %v290, 32
    %v293 = vpop.permute.xlu0 %292
    %295 = vst.msk [vmem:[#allocation3] sm:$0xff] %vm225, %v293
    %s296 = scalar_lea.vmem [#allocation2], 8
    %v297 = vld [vmem:[%s296] sm:$0xff]
    %v298 = vsel %vm225, %v293, 0
    %300 = vmatpush.msra.mxu0 0.0
    %301 = vmatpush.msra.mxu0 0.0
    %302 = vmatpush.msra.mxu0 0.0
    %303 = vmatpush.msra.mxu0 0.0
    %304 = vmatpush.msra.mxu0 0.0
    %305 = vmatpush.msra.mxu0 0.0
    %306 = vmatpush.msra.mxu0 0.0
    %307 = vmatpush.msra.mxu0 0.0
    %308 = vmatpush.msra.mxu0 0.0
    %309 = vmatpush.msra.mxu0 0.0
    %310 = vmatpush.msra.mxu0 0.0
    %311 = vmatpush.msra.mxu0 0.0
    %312 = vmatpush.msra.mxu0 %v221
    %313 = vmatpush.msra.mxu0 %v220
    %314 = vmatpush.msra.mxu0 %v219
    %315 = vmatpush.msra.mxu0 %v218
    %316 = vmatmul.f32.gmra.mxu0 %v298
    %v317 = vpop.f32.mrf.mxu0
    %v318 = vadd.f32 0.0, %v317
    %319 = vdwg.mxu0
    %v320 = vadd.f32 %v297, %v318
    %v321 = vxor.u32 %v320, 2147483648
    %v322 = vmul.f32 %v321, 1.442695
    %v323 = vpow.pop %v322
    %v324 = vadd.f32 %v323, 1.0
    %v325 = vrcp.pop %v324
    %v326 = vmul.f32 %v324, %v325
    %v327 = vsub.f32 1.0, %v326
    %v328 = vmul.f32 %v325, %v327
    %v329 = vadd.f32 %v325, %v328
    %vm330 = vweird.f32 %v324
    %vm331 = vweird.f32 %v325
    %vm332 = vmor %vm330, %vm331
    %v333 = vsel %vm332, %v325, %v329
    %v334 = vand.u32 2147483647, %v324
    %vm335 = vcmp.eq.f32.partialorder %v334, 8.507059e+37
    %v336 = vand.u32 %v324, 2147483648
    %v337 = vor.u32 1.1754944e-38, %v336
    %v338 = vsel %vm335, %v337, %v333
    %v339 = vmul.f32 1.0, %v338
    %v340 = vtanh.pop %v320
    %v341 = vmul.f32 %v339, %v284
    %343 = vrot.lane.b32.xlu0 %v340, 64
    %v344 = vpop.permute.xlu0 %343
    %v346 = vmul.f32 %v339, %v344
    %348 = vrot.lane.b32.xlu0 %v346, 32
    %v349 = vpop.permute.xlu0 %348
    %v351 = vadd.f32 %v341, %v349
    %v352 = vtanh.pop %v351
    %354 = vrot.lane.b32.xlu0 %v352, 64
    %v355 = vpop.permute.xlu0 %354
    %v357 = vmul.f32 %v339, %v355
    %359 = vrot.lane.b32.xlu0 %v357, 32
    %v360 = vpop.permute.xlu0 %359
    %s362 = scalar_lea.vmem [#allocation3], 8
    %363 = vst.msk [vmem:[%s362] sm:$0xff] %vm225, %v360
    %s364 = scalar_lea.vmem [#allocation2], 16
    %v365 = vld [vmem:[%s364] sm:$0xff]
    %v366 = vsel %vm225, %v360, 0
    %368 = vmatpush.msra.mxu0 0.0
    %369 = vmatpush.msra.mxu0 0.0
    %370 = vmatpush.msra.mxu0 0.0
    %371 = vmatpush.msra.mxu0 0.0
    %372 = vmatpush.msra.mxu0 0.0
    %373 = vmatpush.msra.mxu0 0.0
    %374 = vmatpush.msra.mxu0 0.0
    %375 = vmatpush.msra.mxu0 0.0
    %376 = vmatpush.msra.mxu0 0.0
    %377 = vmatpush.msra.mxu0 0.0
    %378 = vmatpush.msra.mxu0 0.0
    %379 = vmatpush.msra.mxu0 0.0
    %380 = vmatpush.msra.mxu0 %v221
    %381 = vmatpush.msra.mxu0 %v220
    %382 = vmatpush.msra.mxu0 %v219
    %383 = vmatpush.msra.mxu0 %v218
    %384 = vmatmul.f32.gmra.mxu0 %v366
    %v385 = vpop.f32.mrf.mxu0
    %v386 = vadd.f32 0.0, %v385
    %387 = vdwg.mxu0
    %v388 = vadd.f32 %v365, %v386
    %v389 = vxor.u32 %v388, 2147483648
    %v390 = vmul.f32 %v389, 1.442695
    %v391 = vpow.pop %v390
    %v392 = vadd.f32 %v391, 1.0
    %v393 = vrcp.pop %v392
    %v394 = vmul.f32 %v392, %v393
    %v395 = vsub.f32 1.0, %v394
    %v396 = vmul.f32 %v393, %v395
    %v397 = vadd.f32 %v393, %v396
    %vm398 = vweird.f32 %v392
    %vm399 = vweird.f32 %v393
    %vm400 = vmor %vm398, %vm399
    %v401 = vsel %vm400, %v393, %v397
    %v402 = vand.u32 2147483647, %v392
    %vm403 = vcmp.eq.f32.partialorder %v402, 8.507059e+37
    %v404 = vand.u32 %v392, 2147483648
    %v405 = vor.u32 1.1754944e-38, %v404
    %v406 = vsel %vm403, %v405, %v401
    %v407 = vmul.f32 1.0, %v406
    %v408 = vtanh.pop %v388
    %v409 = vmul.f32 %v407, %v351
    %411 = vrot.lane.b32.xlu0 %v408, 64
    %v412 = vpop.permute.xlu0 %411
    %v414 = vmul.f32 %v407, %v412
    %416 = vrot.lane.b32.xlu0 %v414, 32
    %v417 = vpop.permute.xlu0 %416
    %v419 = vadd.f32 %v409, %v417
    %v420 = vtanh.pop %v419
    %422 = vrot.lane.b32.xlu0 %v420, 64
    %v423 = vpop.permute.xlu0 %422
    %v425 = vmul.f32 %v407, %v423
    %427 = vrot.lane.b32.xlu0 %v425, 32
    %v428 = vpop.permute.xlu0 %427
    %s430 = scalar_lea.vmem [#allocation3], 16
    %431 = vst.msk [vmem:[%s430] sm:$0xff] %vm225, %v428
    %s432 = scalar_lea.vmem [#allocation2], 24
    %v433 = vld [vmem:[%s432] sm:$0xff]
    %v434 = vsel %vm225, %v428, 0
    %436 = vmatpush.msra.mxu0 0.0
    %437 = vmatpush.msra.mxu0 0.0
    %438 = vmatpush.msra.mxu0 0.0
    %439 = vmatpush.msra.mxu0 0.0
    %440 = vmatpush.msra.mxu0 0.0
    %441 = vmatpush.msra.mxu0 0.0
    %442 = vmatpush.msra.mxu0 0.0
    %443 = vmatpush.msra.mxu0 0.0
    %444 = vmatpush.msra.mxu0 0.0
    %445 = vmatpush.msra.mxu0 0.0
    %446 = vmatpush.msra.mxu0 0.0
    %447 = vmatpush.msra.mxu0 0.0
    %448 = vmatpush.msra.mxu0 %v221
    %449 = vmatpush.msra.mxu0 %v220
    %450 = vmatpush.msra.mxu0 %v219
    %451 = vmatpush.msra.mxu0 %v218
    %452 = vmatmul.f32.gmra.mxu0 %v434
    %v453 = vpop.f32.mrf.mxu0
    %v454 = vadd.f32 0.0, %v453
    %455 = vdwg.mxu0
    %v456 = vadd.f32 %v433, %v454
    %v457 = vxor.u32 %v456, 2147483648
    %v458 = vmul.f32 %v457, 1.442695
    %v459 = vpow.pop %v458
    %v460 = vadd.f32 %v459, 1.0
    %v461 = vrcp.pop %v460
    %v462 = vmul.f32 %v460, %v461
    %v463 = vsub.f32 1.0, %v462
    %v464 = vmul.f32 %v461, %v463
    %v465 = vadd.f32 %v461, %v464
    %vm466 = vweird.f32 %v460
    %vm467 = vweird.f32 %v461
    %vm468 = vmor %vm466, %vm467
    %v469 = vsel %vm468, %v461, %v465
    %v470 = vand.u32 2147483647, %v460
    %vm471 = vcmp.eq.f32.partialorder %v470, 8.507059e+37
    %v472 = vand.u32 %v460, 2147483648
    %v473 = vor.u32 1.1754944e-38, %v472
    %v474 = vsel %vm471, %v473, %v469
    %v475 = vmul.f32 1.0, %v474
    %v476 = vtanh.pop %v456
    %v477 = vmul.f32 %v475, %v419
    %479 = vrot.lane.b32.xlu0 %v476, 64
    %v480 = vpop.permute.xlu0 %479
    %v482 = vmul.f32 %v475, %v480
    %484 = vrot.lane.b32.xlu0 %v482, 32
    %v485 = vpop.permute.xlu0 %484
    %v487 = vadd.f32 %v477, %v485
    %v488 = vtanh.pop %v487
    %490 = vrot.lane.b32.xlu0 %v488, 64
    %v491 = vpop.permute.xlu0 %490
    %v493 = vmul.f32 %v475, %v491
    %495 = vrot.lane.b32.xlu0 %v493, 32
    %v496 = vpop.permute.xlu0 %495
    %s498 = scalar_lea.vmem [#allocation3], 24
    %499 = vst.msk [vmem:[%s498] sm:$0xff] %vm225, %v496
    %s500 = scalar_lea.vmem [#allocation2], 32
    %v501 = vld [vmem:[%s500] sm:$0xff]
    %v502 = vsel %vm225, %v496, 0
    %504 = vmatpush.msra.mxu0 0.0
    %505 = vmatpush.msra.mxu0 0.0
    %506 = vmatpush.msra.mxu0 0.0
    %507 = vmatpush.msra.mxu0 0.0
    %508 = vmatpush.msra.mxu0 0.0
    %509 = vmatpush.msra.mxu0 0.0
    %510 = vmatpush.msra.mxu0 0.0
    %511 = vmatpush.msra.mxu0 0.0
    %512 = vmatpush.msra.mxu0 0.0
    %513 = vmatpush.msra.mxu0 0.0
    %514 = vmatpush.msra.mxu0 0.0
    %515 = vmatpush.msra.mxu0 0.0
    %516 = vmatpush.msra.mxu0 %v221
    %517 = vmatpush.msra.mxu0 %v220
    %518 = vmatpush.msra.mxu0 %v219
    %519 = vmatpush.msra.mxu0 %v218
    %520 = vmatmul.f32.gmra.mxu0 %v502
    %v521 = vpop.f32.mrf.mxu0
    %v522 = vadd.f32 0.0, %v521
    %523 = vdwg.mxu0
    %v524 = vadd.f32 %v501, %v522
    %v525 = vxor.u32 %v524, 2147483648
    %v526 = vmul.f32 %v525, 1.442695
    %v527 = vpow.pop %v526
    %v528 = vadd.f32 %v527, 1.0
    %v529 = vrcp.pop %v528
    %v530 = vmul.f32 %v528, %v529
    %v531 = vsub.f32 1.0, %v530
    %v532 = vmul.f32 %v529, %v531
    %v533 = vadd.f32 %v529, %v532
    %vm534 = vweird.f32 %v528
    %vm535 = vweird.f32 %v529
    %vm536 = vmor %vm534, %vm535
    %v537 = vsel %vm536, %v529, %v533
    %v538 = vand.u32 2147483647, %v528
    %vm539 = vcmp.eq.f32.partialorder %v538, 8.507059e+37
    %v540 = vand.u32 %v528, 2147483648
    %v541 = vor.u32 1.1754944e-38, %v540
    %v542 = vsel %vm539, %v541, %v537
    %v543 = vmul.f32 1.0, %v542
    %v544 = vtanh.pop %v524
    %v545 = vmul.f32 %v543, %v487
    %547 = vrot.lane.b32.xlu0 %v544, 64
    %v548 = vpop.permute.xlu0 %547
    %v550 = vmul.f32 %v543, %v548
    %552 = vrot.lane.b32.xlu0 %v550, 32
    %v553 = vpop.permute.xlu0 %552
    %v555 = vadd.f32 %v545, %v553
    %v556 = vtanh.pop %v555
    %558 = vrot.lane.b32.xlu0 %v556, 64
    %v559 = vpop.permute.xlu0 %558
    %v561 = vmul.f32 %v543, %v559
    %563 = vrot.lane.b32.xlu0 %v561, 32
    %v564 = vpop.permute.xlu0 %563
    %s566 = scalar_lea.vmem [#allocation3], 32
    %567 = vst.msk [vmem:[%s566] sm:$0xff] %vm225, %v564
    %s568 = scalar_lea.vmem [#allocation2], 40
    %v569 = vld [vmem:[%s568] sm:$0xff]
    %v570 = vsel %vm225, %v564, 0
    %572 = vmatpush.msra.mxu0 0.0
    %573 = vmatpush.msra.mxu0 0.0
    %574 = vmatpush.msra.mxu0 0.0
    %575 = vmatpush.msra.mxu0 0.0
    %576 = vmatpush.msra.mxu0 0.0
    %577 = vmatpush.msra.mxu0 0.0
    %578 = vmatpush.msra.mxu0 0.0
    %579 = vmatpush.msra.mxu0 0.0
    %580 = vmatpush.msra.mxu0 0.0
    %581 = vmatpush.msra.mxu0 0.0
    %582 = vmatpush.msra.mxu0 0.0
    %583 = vmatpush.msra.mxu0 0.0
    %584 = vmatpush.msra.mxu0 %v221
    %585 = vmatpush.msra.mxu0 %v220
    %586 = vmatpush.msra.mxu0 %v219
    %587 = vmatpush.msra.mxu0 %v218
    %588 = vmatmul.f32.gmra.mxu0 %v570
    %v589 = vpop.f32.mrf.mxu0
    %v590 = vadd.f32 0.0, %v589
    %591 = vdwg.mxu0
    %v592 = vadd.f32 %v569, %v590
    %v593 = vxor.u32 %v592, 2147483648
    %v594 = vmul.f32 %v593, 1.442695
    %v595 = vpow.pop %v594
    %v596 = vadd.f32 %v595, 1.0
    %v597 = vrcp.pop %v596
    %v598 = vmul.f32 %v596, %v597
    %v599 = vsub.f32 1.0, %v598
    %v600 = vmul.f32 %v597, %v599
    %v601 = vadd.f32 %v597, %v600
    %vm602 = vweird.f32 %v596
    %vm603 = vweird.f32 %v597
    %vm604 = vmor %vm602, %vm603
    %v605 = vsel %vm604, %v597, %v601
    %v606 = vand.u32 2147483647, %v596
    %vm607 = vcmp.eq.f32.partialorder %v606, 8.507059e+37
    %v608 = vand.u32 %v596, 2147483648
    %v609 = vor.u32 1.1754944e-38, %v608
    %v610 = vsel %vm607, %v609, %v605
    %v611 = vmul.f32 1.0, %v610
    %v612 = vtanh.pop %v592
    %v613 = vmul.f32 %v611, %v555
    %615 = vrot.lane.b32.xlu0 %v612, 64
    %v616 = vpop.permute.xlu0 %615
    %v618 = vmul.f32 %v611, %v616
    %620 = vrot.lane.b32.xlu0 %v618, 32
    %v621 = vpop.permute.xlu0 %620
    %v623 = vadd.f32 %v613, %v621
    %v624 = vtanh.pop %v623
    %626 = vrot.lane.b32.xlu0 %v624, 64
    %v627 = vpop.permute.xlu0 %626
    %v629 = vmul.f32 %v611, %v627
    %631 = vrot.lane.b32.xlu0 %v629, 32
    %v632 = vpop.permute.xlu0 %631
    %s634 = scalar_lea.vmem [#allocation3], 40
    %635 = vst.msk [vmem:[%s634] sm:$0xff] %vm225, %v632
    %s636 = scalar_lea.vmem [#allocation2], 48
    %v637 = vld [vmem:[%s636] sm:$0xff]
    %v638 = vsel %vm225, %v632, 0
    %640 = vmatpush.msra.mxu0 0.0
    %641 = vmatpush.msra.mxu0 0.0
    %642 = vmatpush.msra.mxu0 0.0
    %643 = vmatpush.msra.mxu0 0.0
    %644 = vmatpush.msra.mxu0 0.0
    %645 = vmatpush.msra.mxu0 0.0
    %646 = vmatpush.msra.mxu0 0.0
    %647 = vmatpush.msra.mxu0 0.0
    %648 = vmatpush.msra.mxu0 0.0
    %649 = vmatpush.msra.mxu0 0.0
    %650 = vmatpush.msra.mxu0 0.0
    %651 = vmatpush.msra.mxu0 0.0
    %652 = vmatpush.msra.mxu0 %v221
    %653 = vmatpush.msra.mxu0 %v220
    %654 = vmatpush.msra.mxu0 %v219
    %655 = vmatpush.msra.mxu0 %v218
    %656 = vmatmul.f32.gmra.mxu0 %v638
    %v657 = vpop.f32.mrf.mxu0
    %v658 = vadd.f32 0.0, %v657
    %659 = vdwg.mxu0
    %v660 = vadd.f32 %v637, %v658
    %v661 = vxor.u32 %v660, 2147483648
    %v662 = vmul.f32 %v661, 1.442695
    %v663 = vpow.pop %v662
    %v664 = vadd.f32 %v663, 1.0
    %v665 = vrcp.pop %v664
    %v666 = vmul.f32 %v664, %v665
    %v667 = vsub.f32 1.0, %v666
    %v668 = vmul.f32 %v665, %v667
    %v669 = vadd.f32 %v665, %v668
    %vm670 = vweird.f32 %v664
    %vm671 = vweird.f32 %v665
    %vm672 = vmor %vm670, %vm671
    %v673 = vsel %vm672, %v665, %v669
    %v674 = vand.u32 2147483647, %v664
    %vm675 = vcmp.eq.f32.partialorder %v674, 8.507059e+37
    %v676 = vand.u32 %v664, 2147483648
    %v677 = vor.u32 1.1754944e-38, %v676
    %v678 = vsel %vm675, %v677, %v673
    %v679 = vmul.f32 1.0, %v678
    %v680 = vtanh.pop %v660
    %v681 = vmul.f32 %v679, %v623
    %683 = vrot.lane.b32.xlu0 %v680, 64
    %v684 = vpop.permute.xlu0 %683
    %v686 = vmul.f32 %v679, %v684
    %688 = vrot.lane.b32.xlu0 %v686, 32
    %v689 = vpop.permute.xlu0 %688
    %v691 = vadd.f32 %v681, %v689
    %v692 = vtanh.pop %v691
    %694 = vrot.lane.b32.xlu0 %v692, 64
    %v695 = vpop.permute.xlu0 %694
    %v697 = vmul.f32 %v679, %v695
    %699 = vrot.lane.b32.xlu0 %v697, 32
    %v700 = vpop.permute.xlu0 %699
    %s702 = scalar_lea.vmem [#allocation3], 48
    %703 = vst.msk [vmem:[%s702] sm:$0xff] %vm225, %v700
    %s704 = scalar_lea.vmem [#allocation2], 56
    %v705 = vld [vmem:[%s704] sm:$0xff]
    %v706 = vsel %vm225, %v700, 0
    %708 = vmatpush.msra.mxu0 0.0
    %709 = vmatpush.msra.mxu0 0.0
    %710 = vmatpush.msra.mxu0 0.0
    %711 = vmatpush.msra.mxu0 0.0
    %712 = vmatpush.msra.mxu0 0.0
    %713 = vmatpush.msra.mxu0 0.0
    %714 = vmatpush.msra.mxu0 0.0
    %715 = vmatpush.msra.mxu0 0.0
    %716 = vmatpush.msra.mxu0 0.0
    %717 = vmatpush.msra.mxu0 0.0
    %718 = vmatpush.msra.mxu0 0.0
    %719 = vmatpush.msra.mxu0 0.0
    %720 = vmatpush.msra.mxu0 %v221
    %721 = vmatpush.msra.mxu0 %v220
    %722 = vmatpush.msra.mxu0 %v219
    %723 = vmatpush.msra.mxu0 %v218
    %724 = vmatmul.f32.gmra.mxu0 %v706
    %v725 = vpop.f32.mrf.mxu0
    %v726 = vadd.f32 0.0, %v725
    %727 = vdwg.mxu0
    %v728 = vadd.f32 %v705, %v726
    %v729 = vxor.u32 %v728, 2147483648
    %v730 = vmul.f32 %v729, 1.442695
    %v731 = vpow.pop %v730
    %v732 = vadd.f32 %v731, 1.0
    %v733 = vrcp.pop %v732
    %v734 = vmul.f32 %v732, %v733
    %v735 = vsub.f32 1.0, %v734
    %v736 = vmul.f32 %v733, %v735
    %v737 = vadd.f32 %v733, %v736
    %vm738 = vweird.f32 %v732
    %vm739 = vweird.f32 %v733
    %vm740 = vmor %vm738, %vm739
    %v741 = vsel %vm740, %v733, %v737
    %v742 = vand.u32 2147483647, %v732
    %vm743 = vcmp.eq.f32.partialorder %v742, 8.507059e+37
    %v744 = vand.u32 %v732, 2147483648
    %v745 = vor.u32 1.1754944e-38, %v744
    %v746 = vsel %vm743, %v745, %v741
    %v747 = vmul.f32 1.0, %v746
    %v748 = vtanh.pop %v728
    %v749 = vmul.f32 %v747, %v691
    %751 = vrot.lane.b32.xlu0 %v748, 64
    %v752 = vpop.permute.xlu0 %751
    %v754 = vmul.f32 %v747, %v752
    %756 = vrot.lane.b32.xlu0 %v754, 32
    %v757 = vpop.permute.xlu0 %756
    %v759 = vadd.f32 %v749, %v757
    %v760 = vtanh.pop %v759
    %762 = vrot.lane.b32.xlu0 %v760, 64
    %v763 = vpop.permute.xlu0 %762
    %v765 = vmul.f32 %v747, %v763
    %767 = vrot.lane.b32.xlu0 %v765, 32
    %v768 = vpop.permute.xlu0 %767
    %s770 = scalar_lea.vmem [#allocation3], 56
    %771 = vst.msk [vmem:[%s770] sm:$0xff] %vm225, %v768
    %772 = vst.msk [vmem:[#allocation15] sm:$0xff] %vm225, %v768
    %774 = vrot.lane.b32.xlu0 %v759, 96
    %v775 = vpop.permute.xlu0 %774
    %777 = vst.msk [vmem:[#allocation16] sm:$0xff] %vm225, %v775
    %v778 = vld [vmem:[#allocation3] sm:$0xff]
    %v779 = vld [vmem:[#allocation3 + $0x8] sm:$0xff]
    %v780 = vld [vmem:[#allocation3 + $0x10] sm:$0xff]
    %v781 = vld [vmem:[#allocation3 + $0x18] sm:$0xff]
    %v782 = vld [vmem:[#allocation3 + $0x20] sm:$0xff]
    %v783 = vld [vmem:[#allocation3 + $0x28] sm:$0xff]
    %v784 = vld [vmem:[#allocation3 + $0x30] sm:$0xff]
    %v785 = vld [vmem:[#allocation3 + $0x38] sm:$0xff]
    %v786 = vld [vmem:[#allocation12] sm:$0xff]
    %v787 = vld [vmem:[#allocation12 + $0x8] sm:$0xff]
    %v788 = vld [vmem:[#allocation12 + $0x10] sm:$0xff]
    %v789 = vld [vmem:[#allocation12 + $0x18] sm:$0xff]
    %s790 = scalar_lea.vmem %s6, 1
    %v791 = vld [vmem:[%s790] sm:$0x1]
    %v793 = vperm.slane %v791, 0
    %v796 = vsel %vm225, %v778, 0
    %v799 = vsel %vm225, %v779, 0
    %v802 = vsel %vm225, %v780, 0
    %v805 = vsel %vm225, %v781, 0
    %v808 = vsel %vm225, %v782, 0
    %v811 = vsel %vm225, %v783, 0
    %v814 = vsel %vm225, %v784, 0
    %v817 = vsel %vm225, %v785, 0
    %819 = vmatpush.msra.mxu0 0.0
    %820 = vmatpush.msra.mxu0 0.0
    %821 = vmatpush.msra.mxu0 0.0
    %822 = vmatpush.msra.mxu0 0.0
    %823 = vmatpush.msra.mxu0 0.0
    %824 = vmatpush.msra.mxu0 0.0
    %825 = vmatpush.msra.mxu0 0.0
    %826 = vmatpush.msra.mxu0 0.0
    %827 = vmatpush.msra.mxu0 0.0
    %828 = vmatpush.msra.mxu0 0.0
    %829 = vmatpush.msra.mxu0 0.0
    %830 = vmatpush.msra.mxu0 0.0
    %831 = vmatpush.msra.mxu0 %v789
    %832 = vmatpush.msra.mxu0 %v788
    %833 = vmatpush.msra.mxu0 %v787
    %834 = vmatpush.msra.mxu0 %v786
    %835 = vmatmul.f32.gmra.mxu0 %v796
    %v836 = vpop.f32.mrf.mxu0
    %v837 = vadd.f32 %v793, %v836
    %838 = vmatmul.f32.gmra.mxu0 %v799
    %v839 = vpop.f32.mrf.mxu0
    %v840 = vadd.f32 %v793, %v839
    %841 = vmatmul.f32.gmra.mxu0 %v802
    %v842 = vpop.f32.mrf.mxu0
    %v843 = vadd.f32 %v793, %v842
    %844 = vmatmul.f32.gmra.mxu0 %v805
    %v845 = vpop.f32.mrf.mxu0
    %v846 = vadd.f32 %v793, %v845
    %847 = vmatmul.f32.gmra.mxu0 %v808
    %v848 = vpop.f32.mrf.mxu0
    %v849 = vadd.f32 %v793, %v848
    %850 = vmatmul.f32.gmra.mxu0 %v811
    %v851 = vpop.f32.mrf.mxu0
    %v852 = vadd.f32 %v793, %v851
    %853 = vmatmul.f32.gmra.mxu0 %v814
    %v854 = vpop.f32.mrf.mxu0
    %v855 = vadd.f32 %v793, %v854
    %856 = vmatmul.f32.gmra.mxu0 %v817
    %v857 = vpop.f32.mrf.mxu0
    %v858 = vadd.f32 %v793, %v857
    %859 = vdwg.mxu0
    %860 = vst [vmem:[#allocation2] sm:$0xff] %v837
    %861 = vst [vmem:[#allocation2 + $0x8] sm:$0xff] %v840
    %862 = vst [vmem:[#allocation2 + $0x10] sm:$0xff] %v843
    %863 = vst [vmem:[#allocation2 + $0x18] sm:$0xff] %v846
    %864 = vst [vmem:[#allocation2 + $0x20] sm:$0xff] %v849
    %865 = vst [vmem:[#allocation2 + $0x28] sm:$0xff] %v852
    %866 = vst [vmem:[#allocation2 + $0x30] sm:$0xff] %v855
    %867 = vst [vmem:[#allocation2 + $0x38] sm:$0xff] %v858
    %s868 = scalar_lea.vmem [#allocation13], 32
    %v869 = vld [vmem:[%s868] sm:$0xff]
    %v870 = vld [vmem:[%s868 + $0x8] sm:$0xff]
    %v871 = vld [vmem:[%s868 + $0x10] sm:$0xff]
    %v872 = vld [vmem:[%s868 + $0x18] sm:$0xff]
    %s873 = scalar_lea.vmem [#allocation7], 8
    %v874 = vld [vmem:[%s873] sm:$0xff]
    %s875 = scalar_lea.vmem [#allocation9], 8
    %v876 = vld [vmem:[%s875] sm:$0xff]
    %v877 = vld [vmem:[#allocation2] sm:$0xff]
    %v879 = vsel %vm225, %v874, 0
    %881 = vmatpush.msra.mxu0 0.0
    %882 = vmatpush.msra.mxu0 0.0
    %883 = vmatpush.msra.mxu0 0.0
    %884 = vmatpush.msra.mxu0 0.0
    %885 = vmatpush.msra.mxu0 0.0
    %886 = vmatpush.msra.mxu0 0.0
    %887 = vmatpush.msra.mxu0 0.0
    %888 = vmatpush.msra.mxu0 0.0
    %889 = vmatpush.msra.mxu0 0.0
    %890 = vmatpush.msra.mxu0 0.0
    %891 = vmatpush.msra.mxu0 0.0
    %892 = vmatpush.msra.mxu0 0.0
    %893 = vmatpush.msra.mxu0 %v872
    %894 = vmatpush.msra.mxu0 %v871
    %895 = vmatpush.msra.mxu0 %v870
    %896 = vmatpush.msra.mxu0 %v869
    %897 = vmatmul.f32.gmra.mxu0 %v879
    %v898 = vpop.f32.mrf.mxu0
    %v899 = vadd.f32 0.0, %v898
    %900 = vdwg.mxu0
    %v901 = vadd.f32 %v877, %v899
    %v902 = vxor.u32 %v901, 2147483648
    %v903 = vmul.f32 %v902, 1.442695
    %v904 = vpow.pop %v903
    %v905 = vadd.f32 %v904, 1.0
    %v906 = vrcp.pop %v905
    %v907 = vmul.f32 %v905, %v906
    %v908 = vsub.f32 1.0, %v907
    %v909 = vmul.f32 %v906, %v908
    %v910 = vadd.f32 %v906, %v909
    %vm911 = vweird.f32 %v905
    %vm912 = vweird.f32 %v906
    %vm913 = vmor %vm911, %vm912
    %v914 = vsel %vm913, %v906, %v910
    %v915 = vand.u32 2147483647, %v905
    %vm916 = vcmp.eq.f32.partialorder %v915, 8.507059e+37
    %v917 = vand.u32 %v905, 2147483648
    %v918 = vor.u32 1.1754944e-38, %v917
    %v919 = vsel %vm916, %v918, %v914
    %v920 = vmul.f32 1.0, %v919
    %v921 = vtanh.pop %v901
    %923 = vrot.lane.b32.xlu0 %v876, 32
    %v924 = vpop.permute.xlu0 %923
    %v926 = vmul.f32 %v920, %v924
    %928 = vrot.lane.b32.xlu0 %v921, 64
    %v929 = vpop.permute.xlu0 %928
    %v931 = vmul.f32 %v920, %v929
    %933 = vrot.lane.b32.xlu0 %v931, 32
    %v934 = vpop.permute.xlu0 %933
    %v936 = vadd.f32 %v926, %v934
    %v937 = vtanh.pop %v936
    %939 = vrot.lane.b32.xlu0 %v937, 64
    %v940 = vpop.permute.xlu0 %939
    %v942 = vmul.f32 %v920, %v940
    %v943 = vld [vmem:[%s296] sm:$0xff]
    %945 = vrot.lane.b32.xlu0 %v942, 32
    %v946 = vpop.permute.xlu0 %945
    %v947 = vsel %vm225, %v946, 0
    %949 = vmatpush.msra.mxu0 0.0
    %950 = vmatpush.msra.mxu0 0.0
    %951 = vmatpush.msra.mxu0 0.0
    %952 = vmatpush.msra.mxu0 0.0
    %953 = vmatpush.msra.mxu0 0.0
    %954 = vmatpush.msra.mxu0 0.0
    %955 = vmatpush.msra.mxu0 0.0
    %956 = vmatpush.msra.mxu0 0.0
    %957 = vmatpush.msra.mxu0 0.0
    %958 = vmatpush.msra.mxu0 0.0
    %959 = vmatpush.msra.mxu0 0.0
    %960 = vmatpush.msra.mxu0 0.0
    %961 = vmatpush.msra.mxu0 %v872
    %962 = vmatpush.msra.mxu0 %v871
    %963 = vmatpush.msra.mxu0 %v870
    %964 = vmatpush.msra.mxu0 %v869
    %965 = vmatmul.f32.gmra.mxu0 %v947
    %v966 = vpop.f32.mrf.mxu0
    %v967 = vadd.f32 0.0, %v966
    %968 = vdwg.mxu0
    %v969 = vadd.f32 %v943, %v967
    %v970 = vxor.u32 %v969, 2147483648
    %v971 = vmul.f32 %v970, 1.442695
    %v972 = vpow.pop %v971
    %v973 = vadd.f32 %v972, 1.0
    %v974 = vrcp.pop %v973
    %v975 = vmul.f32 %v973, %v974
    %v976 = vsub.f32 1.0, %v975
    %v977 = vmul.f32 %v974, %v976
    %v978 = vadd.f32 %v974, %v977
    %vm979 = vweird.f32 %v973
    %vm980 = vweird.f32 %v974
    %vm981 = vmor %vm979, %vm980
    %v982 = vsel %vm981, %v974, %v978
    %v983 = vand.u32 2147483647, %v973
    %vm984 = vcmp.eq.f32.partialorder %v983, 8.507059e+37
    %v985 = vand.u32 %v973, 2147483648
    %v986 = vor.u32 1.1754944e-38, %v985
    %v987 = vsel %vm984, %v986, %v982
    %v988 = vmul.f32 1.0, %v987
    %v989 = vtanh.pop %v969
    %v990 = vmul.f32 %v988, %v936
    %992 = vrot.lane.b32.xlu0 %v989, 64
    %v993 = vpop.permute.xlu0 %992
    %v995 = vmul.f32 %v988, %v993
    %997 = vrot.lane.b32.xlu0 %v995, 32
    %v998 = vpop.permute.xlu0 %997
    %v1000 = vadd.f32 %v990, %v998
    %v1001 = vtanh.pop %v1000
    %1003 = vrot.lane.b32.xlu0 %v1001, 64
    %v1004 = vpop.permute.xlu0 %1003
    %v1006 = vmul.f32 %v988, %v1004
    %v1007 = vld [vmem:[%s364] sm:$0xff]
    %1009 = vrot.lane.b32.xlu0 %v1006, 32
    %v1010 = vpop.permute.xlu0 %1009
    %v1011 = vsel %vm225, %v1010, 0
    %1013 = vmatpush.msra.mxu0 0.0
    %1014 = vmatpush.msra.mxu0 0.0
    %1015 = vmatpush.msra.mxu0 0.0
    %1016 = vmatpush.msra.mxu0 0.0
    %1017 = vmatpush.msra.mxu0 0.0
    %1018 = vmatpush.msra.mxu0 0.0
    %1019 = vmatpush.msra.mxu0 0.0
    %1020 = vmatpush.msra.mxu0 0.0
    %1021 = vmatpush.msra.mxu0 0.0
    %1022 = vmatpush.msra.mxu0 0.0
    %1023 = vmatpush.msra.mxu0 0.0
    %1024 = vmatpush.msra.mxu0 0.0
    %1025 = vmatpush.msra.mxu0 %v872
    %1026 = vmatpush.msra.mxu0 %v871
    %1027 = vmatpush.msra.mxu0 %v870
    %1028 = vmatpush.msra.mxu0 %v869
    %1029 = vmatmul.f32.gmra.mxu0 %v1011
    %v1030 = vpop.f32.mrf.mxu0
    %v1031 = vadd.f32 0.0, %v1030
    %1032 = vdwg.mxu0
    %v1033 = vadd.f32 %v1007, %v1031
    %v1034 = vxor.u32 %v1033, 2147483648
    %v1035 = vmul.f32 %v1034, 1.442695
    %v1036 = vpow.pop %v1035
    %v1037 = vadd.f32 %v1036, 1.0
    %v1038 = vrcp.pop %v1037
    %v1039 = vmul.f32 %v1037, %v1038
    %v1040 = vsub.f32 1.0, %v1039
    %v1041 = vmul.f32 %v1038, %v1040
    %v1042 = vadd.f32 %v1038, %v1041
    %vm1043 = vweird.f32 %v1037
    %vm1044 = vweird.f32 %v1038
    %vm1045 = vmor %vm1043, %vm1044
    %v1046 = vsel %vm1045, %v1038, %v1042
    %v1047 = vand.u32 2147483647, %v1037
    %vm1048 = vcmp.eq.f32.partialorder %v1047, 8.507059e+37
    %v1049 = vand.u32 %v1037, 2147483648
    %v1050 = vor.u32 1.1754944e-38, %v1049
    %v1051 = vsel %vm1048, %v1050, %v1046
    %v1052 = vmul.f32 1.0, %v1051
    %v1053 = vtanh.pop %v1033
    %v1054 = vmul.f32 %v1052, %v1000
    %1056 = vrot.lane.b32.xlu0 %v1053, 64
    %v1057 = vpop.permute.xlu0 %1056
    %v1059 = vmul.f32 %v1052, %v1057
    %1061 = vrot.lane.b32.xlu0 %v1059, 32
    %v1062 = vpop.permute.xlu0 %1061
    %v1064 = vadd.f32 %v1054, %v1062
    %v1065 = vtanh.pop %v1064
    %1067 = vrot.lane.b32.xlu0 %v1065, 64
    %v1068 = vpop.permute.xlu0 %1067
    %v1070 = vmul.f32 %v1052, %v1068
    %v1071 = vld [vmem:[%s432] sm:$0xff]
    %1073 = vrot.lane.b32.xlu0 %v1070, 32
    %v1074 = vpop.permute.xlu0 %1073
    %v1075 = vsel %vm225, %v1074, 0
    %1077 = vmatpush.msra.mxu0 0.0
    %1078 = vmatpush.msra.mxu0 0.0
    %1079 = vmatpush.msra.mxu0 0.0
    %1080 = vmatpush.msra.mxu0 0.0
    %1081 = vmatpush.msra.mxu0 0.0
    %1082 = vmatpush.msra.mxu0 0.0
    %1083 = vmatpush.msra.mxu0 0.0
    %1084 = vmatpush.msra.mxu0 0.0
    %1085 = vmatpush.msra.mxu0 0.0
    %1086 = vmatpush.msra.mxu0 0.0
    %1087 = vmatpush.msra.mxu0 0.0
    %1088 = vmatpush.msra.mxu0 0.0
    %1089 = vmatpush.msra.mxu0 %v872
    %1090 = vmatpush.msra.mxu0 %v871
    %1091 = vmatpush.msra.mxu0 %v870
    %1092 = vmatpush.msra.mxu0 %v869
    %1093 = vmatmul.f32.gmra.mxu0 %v1075
    %v1094 = vpop.f32.mrf.mxu0
    %v1095 = vadd.f32 0.0, %v1094
    %1096 = vdwg.mxu0
    %v1097 = vadd.f32 %v1071, %v1095
    %v1098 = vxor.u32 %v1097, 2147483648
    %v1099 = vmul.f32 %v1098, 1.442695
    %v1100 = vpow.pop %v1099
    %v1101 = vadd.f32 %v1100, 1.0
    %v1102 = vrcp.pop %v1101
    %v1103 = vmul.f32 %v1101, %v1102
    %v1104 = vsub.f32 1.0, %v1103
    %v1105 = vmul.f32 %v1102, %v1104
    %v1106 = vadd.f32 %v1102, %v1105
    %vm1107 = vweird.f32 %v1101
    %vm1108 = vweird.f32 %v1102
    %vm1109 = vmor %vm1107, %vm1108
    %v1110 = vsel %vm1109, %v1102, %v1106
    %v1111 = vand.u32 2147483647, %v1101
    %vm1112 = vcmp.eq.f32.partialorder %v1111, 8.507059e+37
    %v1113 = vand.u32 %v1101, 2147483648
    %v1114 = vor.u32 1.1754944e-38, %v1113
    %v1115 = vsel %vm1112, %v1114, %v1110
    %v1116 = vmul.f32 1.0, %v1115
    %v1117 = vtanh.pop %v1097
    %v1118 = vmul.f32 %v1116, %v1064
    %1120 = vrot.lane.b32.xlu0 %v1117, 64
    %v1121 = vpop.permute.xlu0 %1120
    %v1123 = vmul.f32 %v1116, %v1121
    %1125 = vrot.lane.b32.xlu0 %v1123, 32
    %v1126 = vpop.permute.xlu0 %1125
    %v1128 = vadd.f32 %v1118, %v1126
    %v1129 = vtanh.pop %v1128
    %1131 = vrot.lane.b32.xlu0 %v1129, 64
    %v1132 = vpop.permute.xlu0 %1131
    %v1134 = vmul.f32 %v1116, %v1132
    %v1135 = vld [vmem:[%s500] sm:$0xff]
    %1137 = vrot.lane.b32.xlu0 %v1134, 32
    %v1138 = vpop.permute.xlu0 %1137
    %v1139 = vsel %vm225, %v1138, 0
    %1141 = vmatpush.msra.mxu0 0.0
    %1142 = vmatpush.msra.mxu0 0.0
    %1143 = vmatpush.msra.mxu0 0.0
    %1144 = vmatpush.msra.mxu0 0.0
    %1145 = vmatpush.msra.mxu0 0.0
    %1146 = vmatpush.msra.mxu0 0.0
    %1147 = vmatpush.msra.mxu0 0.0
    %1148 = vmatpush.msra.mxu0 0.0
    %1149 = vmatpush.msra.mxu0 0.0
    %1150 = vmatpush.msra.mxu0 0.0
    %1151 = vmatpush.msra.mxu0 0.0
    %1152 = vmatpush.msra.mxu0 0.0
    %1153 = vmatpush.msra.mxu0 %v872
    %1154 = vmatpush.msra.mxu0 %v871
    %1155 = vmatpush.msra.mxu0 %v870
    %1156 = vmatpush.msra.mxu0 %v869
    %1157 = vmatmul.f32.gmra.mxu0 %v1139
    %v1158 = vpop.f32.mrf.mxu0
    %v1159 = vadd.f32 0.0, %v1158
    %1160 = vdwg.mxu0
    %v1161 = vadd.f32 %v1135, %v1159
    %v1162 = vxor.u32 %v1161, 2147483648
    %v1163 = vmul.f32 %v1162, 1.442695
    %v1164 = vpow.pop %v1163
    %v1165 = vadd.f32 %v1164, 1.0
    %v1166 = vrcp.pop %v1165
    %v1167 = vmul.f32 %v1165, %v1166
    %v1168 = vsub.f32 1.0, %v1167
    %v1169 = vmul.f32 %v1166, %v1168
    %v1170 = vadd.f32 %v1166, %v1169
    %vm1171 = vweird.f32 %v1165
    %vm1172 = vweird.f32 %v1166
    %vm1173 = vmor %vm1171, %vm1172
    %v1174 = vsel %vm1173, %v1166, %v1170
    %v1175 = vand.u32 2147483647, %v1165
    %vm1176 = vcmp.eq.f32.partialorder %v1175, 8.507059e+37
    %v1177 = vand.u32 %v1165, 2147483648
    %v1178 = vor.u32 1.1754944e-38, %v1177
    %v1179 = vsel %vm1176, %v1178, %v1174
    %v1180 = vmul.f32 1.0, %v1179
    %v1181 = vtanh.pop %v1161
    %v1182 = vmul.f32 %v1180, %v1128
    %1184 = vrot.lane.b32.xlu0 %v1181, 64
    %v1185 = vpop.permute.xlu0 %1184
    %v1187 = vmul.f32 %v1180, %v1185
    %1189 = vrot.lane.b32.xlu0 %v1187, 32
    %v1190 = vpop.permute.xlu0 %1189
    %v1192 = vadd.f32 %v1182, %v1190
    %v1193 = vtanh.pop %v1192
    %1195 = vrot.lane.b32.xlu0 %v1193, 64
    %v1196 = vpop.permute.xlu0 %1195
    %v1198 = vmul.f32 %v1180, %v1196
    %v1199 = vld [vmem:[%s568] sm:$0xff]
    %1201 = vrot.lane.b32.xlu0 %v1198, 32
    %v1202 = vpop.permute.xlu0 %1201
    %v1203 = vsel %vm225, %v1202, 0
    %1205 = vmatpush.msra.mxu0 0.0
    %1206 = vmatpush.msra.mxu0 0.0
    %1207 = vmatpush.msra.mxu0 0.0
    %1208 = vmatpush.msra.mxu0 0.0
    %1209 = vmatpush.msra.mxu0 0.0
    %1210 = vmatpush.msra.mxu0 0.0
    %1211 = vmatpush.msra.mxu0 0.0
    %1212 = vmatpush.msra.mxu0 0.0
    %1213 = vmatpush.msra.mxu0 0.0
    %1214 = vmatpush.msra.mxu0 0.0
    %1215 = vmatpush.msra.mxu0 0.0
    %1216 = vmatpush.msra.mxu0 0.0
    %1217 = vmatpush.msra.mxu0 %v872
    %1218 = vmatpush.msra.mxu0 %v871
    %1219 = vmatpush.msra.mxu0 %v870
    %1220 = vmatpush.msra.mxu0 %v869
    %1221 = vmatmul.f32.gmra.mxu0 %v1203
    %v1222 = vpop.f32.mrf.mxu0
    %v1223 = vadd.f32 0.0, %v1222
    %1224 = vdwg.mxu0
    %v1225 = vadd.f32 %v1199, %v1223
    %v1226 = vxor.u32 %v1225, 2147483648
    %v1227 = vmul.f32 %v1226, 1.442695
    %v1228 = vpow.pop %v1227
    %v1229 = vadd.f32 %v1228, 1.0
    %v1230 = vrcp.pop %v1229
    %v1231 = vmul.f32 %v1229, %v1230
    %v1232 = vsub.f32 1.0, %v1231
    %v1233 = vmul.f32 %v1230, %v1232
    %v1234 = vadd.f32 %v1230, %v1233
    %vm1235 = vweird.f32 %v1229
    %vm1236 = vweird.f32 %v1230
    %vm1237 = vmor %vm1235, %vm1236
    %v1238 = vsel %vm1237, %v1230, %v1234
    %v1239 = vand.u32 2147483647, %v1229
    %vm1240 = vcmp.eq.f32.partialorder %v1239, 8.507059e+37
    %v1241 = vand.u32 %v1229, 2147483648
    %v1242 = vor.u32 1.1754944e-38, %v1241
    %v1243 = vsel %vm1240, %v1242, %v1238
    %v1244 = vmul.f32 1.0, %v1243
    %v1245 = vtanh.pop %v1225
    %v1246 = vmul.f32 %v1244, %v1192
    %1248 = vrot.lane.b32.xlu0 %v1245, 64
    %v1249 = vpop.permute.xlu0 %1248
    %v1251 = vmul.f32 %v1244, %v1249
    %1253 = vrot.lane.b32.xlu0 %v1251, 32
    %v1254 = vpop.permute.xlu0 %1253
    %v1256 = vadd.f32 %v1246, %v1254
    %v1257 = vtanh.pop %v1256
    %1259 = vrot.lane.b32.xlu0 %v1257, 64
    %v1260 = vpop.permute.xlu0 %1259
    %v1262 = vmul.f32 %v1244, %v1260
    %v1263 = vld [vmem:[%s636] sm:$0xff]
    %1265 = vrot.lane.b32.xlu0 %v1262, 32
    %v1266 = vpop.permute.xlu0 %1265
    %v1267 = vsel %vm225, %v1266, 0
    %1269 = vmatpush.msra.mxu0 0.0
    %1270 = vmatpush.msra.mxu0 0.0
    %1271 = vmatpush.msra.mxu0 0.0
    %1272 = vmatpush.msra.mxu0 0.0
    %1273 = vmatpush.msra.mxu0 0.0
    %1274 = vmatpush.msra.mxu0 0.0
    %1275 = vmatpush.msra.mxu0 0.0
    %1276 = vmatpush.msra.mxu0 0.0
    %1277 = vmatpush.msra.mxu0 0.0
    %1278 = vmatpush.msra.mxu0 0.0
    %1279 = vmatpush.msra.mxu0 0.0
    %1280 = vmatpush.msra.mxu0 0.0
    %1281 = vmatpush.msra.mxu0 %v872
    %1282 = vmatpush.msra.mxu0 %v871
    %1283 = vmatpush.msra.mxu0 %v870
    %1284 = vmatpush.msra.mxu0 %v869
    %1285 = vmatmul.f32.gmra.mxu0 %v1267
    %v1286 = vpop.f32.mrf.mxu0
    %v1287 = vadd.f32 0.0, %v1286
    %1288 = vdwg.mxu0
    %v1289 = vadd.f32 %v1263, %v1287
    %v1290 = vxor.u32 %v1289, 2147483648
    %v1291 = vmul.f32 %v1290, 1.442695
    %v1292 = vpow.pop %v1291
    %v1293 = vadd.f32 %v1292, 1.0
    %v1294 = vrcp.pop %v1293
    %v1295 = vmul.f32 %v1293, %v1294
    %v1296 = vsub.f32 1.0, %v1295
    %v1297 = vmul.f32 %v1294, %v1296
    %v1298 = vadd.f32 %v1294, %v1297
    %vm1299 = vweird.f32 %v1293
    %vm1300 = vweird.f32 %v1294
    %vm1301 = vmor %vm1299, %vm1300
    %v1302 = vsel %vm1301, %v1294, %v1298
    %v1303 = vand.u32 2147483647, %v1293
    %vm1304 = vcmp.eq.f32.partialorder %v1303, 8.507059e+37
    %v1305 = vand.u32 %v1293, 2147483648
    %v1306 = vor.u32 1.1754944e-38, %v1305
    %v1307 = vsel %vm1304, %v1306, %v1302
    %v1308 = vmul.f32 1.0, %v1307
    %v1309 = vtanh.pop %v1289
    %v1310 = vmul.f32 %v1308, %v1256
    %1312 = vrot.lane.b32.xlu0 %v1309, 64
    %v1313 = vpop.permute.xlu0 %1312
    %v1315 = vmul.f32 %v1308, %v1313
    %1317 = vrot.lane.b32.xlu0 %v1315, 32
    %v1318 = vpop.permute.xlu0 %1317
    %v1320 = vadd.f32 %v1310, %v1318
    %v1321 = vtanh.pop %v1320
    %1323 = vrot.lane.b32.xlu0 %v1321, 64
    %v1324 = vpop.permute.xlu0 %1323
    %v1326 = vmul.f32 %v1308, %v1324
    %v1327 = vld [vmem:[%s704] sm:$0xff]
    %1329 = vrot.lane.b32.xlu0 %v1326, 32
    %v1330 = vpop.permute.xlu0 %1329
    %v1331 = vsel %vm225, %v1330, 0
    %1333 = vmatpush.msra.mxu0 0.0
    %1334 = vmatpush.msra.mxu0 0.0
    %1335 = vmatpush.msra.mxu0 0.0
    %1336 = vmatpush.msra.mxu0 0.0
    %1337 = vmatpush.msra.mxu0 0.0
    %1338 = vmatpush.msra.mxu0 0.0
    %1339 = vmatpush.msra.mxu0 0.0
    %1340 = vmatpush.msra.mxu0 0.0
    %1341 = vmatpush.msra.mxu0 0.0
    %1342 = vmatpush.msra.mxu0 0.0
    %1343 = vmatpush.msra.mxu0 0.0
    %1344 = vmatpush.msra.mxu0 0.0
    %1345 = vmatpush.msra.mxu0 %v872
    %1346 = vmatpush.msra.mxu0 %v871
    %1347 = vmatpush.msra.mxu0 %v870
    %1348 = vmatpush.msra.mxu0 %v869
    %1349 = vmatmul.f32.gmra.mxu0 %v1331
    %v1350 = vpop.f32.mrf.mxu0
    %v1351 = vadd.f32 0.0, %v1350
    %1352 = vdwg.mxu0
    %v1353 = vadd.f32 %v1327, %v1351
    %v1354 = vxor.u32 %v1353, 2147483648
    %v1355 = vmul.f32 %v1354, 1.442695
    %v1356 = vpow.pop %v1355
    %v1357 = vadd.f32 %v1356, 1.0
    %v1358 = vrcp.pop %v1357
    %v1359 = vmul.f32 %v1357, %v1358
    %v1360 = vsub.f32 1.0, %v1359
    %v1361 = vmul.f32 %v1358, %v1360
    %v1362 = vadd.f32 %v1358, %v1361
    %vm1363 = vweird.f32 %v1357
    %vm1364 = vweird.f32 %v1358
    %vm1365 = vmor %vm1363, %vm1364
    %v1366 = vsel %vm1365, %v1358, %v1362
    %v1367 = vand.u32 2147483647, %v1357
    %vm1368 = vcmp.eq.f32.partialorder %v1367, 8.507059e+37
    %v1369 = vand.u32 %v1357, 2147483648
    %v1370 = vor.u32 1.1754944e-38, %v1369
    %v1371 = vsel %vm1368, %v1370, %v1366
    %v1372 = vmul.f32 1.0, %v1371
    %v1373 = vtanh.pop %v1353
    %v1374 = vmul.f32 %v1372, %v1320
    %1376 = vrot.lane.b32.xlu0 %v1373, 64
    %v1377 = vpop.permute.xlu0 %1376
    %v1379 = vmul.f32 %v1372, %v1377
    %1381 = vrot.lane.b32.xlu0 %v1379, 32
    %v1382 = vpop.permute.xlu0 %1381
    %v1384 = vadd.f32 %v1374, %v1382
    %v1385 = vtanh.pop %v1384
    %1387 = vrot.lane.b32.xlu0 %v1385, 64
    %v1388 = vpop.permute.xlu0 %1387
    %v1390 = vmul.f32 %v1372, %v1388
    %1392 = vrot.lane.b32.xlu0 %v1390, 32
    %v1393 = vpop.permute.xlu0 %1392
    %s1395 = scalar_lea.vmem [#allocation15], 8
    %1396 = vst.msk [vmem:[%s1395] sm:$0xff] %vm225, %v1393
    %1398 = vrot.lane.b32.xlu0 %v1384, 96
    %v1399 = vpop.permute.xlu0 %1398
    %s1401 = scalar_lea.vmem [#allocation16], 8
    %1402 = vst.msk [vmem:[%s1401] sm:$0xff] %vm225, %v1399
    // Predicated region
    $region54: #{tpu_custom_call.1} parent=1 // pred_check
      _
    $region55: #{tpu_custom_call.1} parent=1 // pred_check_branch
      %1404 = sbr.rel (0) target = $region57
    $region56: #{tpu_custom_call.1} parent=1 // pred_region
      %1406 = vsyncadd [#allocation6], 0
      %s1407 = sshll.u32 [#allocation15], 4
      %s1408 = int_to_ptr.vmem [resolvable:$true] %s1407
      %s1409 = sshll.u32 %s7, 4
      %s1410 = int_to_ptr.hbm [resolvable:$true] %s1409
      %1415 = dma.vmem_to_hbm [thread:$0]  %s1408, 256, %s1410, [#allocation6], 128, 128, 8
    $region57: #{tpu_custom_call.1} parent=1 // pred_fallthru
      _
    // Predicated region
    $region58: #{tpu_custom_call.1} parent=1 // pred_check
      _
    $region59: #{tpu_custom_call.1} parent=1 // pred_check_branch
      %1417 = sbr.rel (0) target = $region61
    $region60: #{tpu_custom_call.1} parent=1 // pred_region
      %1419 = vsyncadd [#allocation17], 0
      %s1420 = sshll.u32 [#allocation16], 4
      %s1421 = int_to_ptr.vmem [resolvable:$true] %s1420
      %s1422 = sshll.u32 %s8, 4
      %s1423 = int_to_ptr.hbm [resolvable:$true] %s1422
      %1428 = dma.vmem_to_hbm [thread:$0]  %s1421, 256, %s1423, [#allocation17], 128, 128, 8
    $region61: #{tpu_custom_call.1} parent=1 // pred_fallthru
      _
    // Predicated region
    $region62: #{tpu_custom_call.1} parent=1 // pred_check
      _
    $region63: #{tpu_custom_call.1} parent=1 // pred_check_branch
      %1430 = sbr.rel (0) target = $region65
    $region64: #{tpu_custom_call.1} parent=1 // pred_region
      %1432 = dma.done [#allocation6], 256
    $region65: #{tpu_custom_call.1} parent=1 // pred_fallthru
      _
    // Predicated region
    $region66: #{tpu_custom_call.1} parent=1 // pred_check
      _
    $region67: #{tpu_custom_call.1} parent=1 // pred_check_branch
      %1434 = sbr.rel (0) target = $region69
    $region68: #{tpu_custom_call.1} parent=1 // pred_region
      %1436 = dma.done [#allocation17], 256
    $region69: #{tpu_custom_call.1} parent=1 // pred_fallthru
      _
    %1437 = vsyncpa [#allocation5], 1
    %1438 = vsyncpa [#allocation8], 1
    %1439 = vsyncpa [#allocation11], 1
    %1440 = vsyncpa [#allocation14], 1
    %1441 = vsyncpa [#allocation6], 1
    %1442 = vsyncpa [#allocation17], 1

</llo_original>
